<compile_context>
chip_gen: v7x
topology: tpu7x:2x2x1
jax: 0.10.0
libtpu: 0.0.40
codegen_flags: <defaults>
</compile_context>

<pallas_src>
import jax
import jax.numpy as jnp
from jax import lax
from jax.experimental import pallas as pl
from jax.experimental.pallas import tpu as pltpu

_CL = 8  # left halo columns in the flat conv2 scratch (sublane-aligned interior)


def _round_up(x, m):
    return (x + m - 1) // m * m


def _vmem_limit_bytes():
    try:
        cap = int(pltpu.get_tpu_info().vmem_capacity_bytes)
    except Exception:
        cap = 64 * 1024 * 1024  # conservative fallback (v7x per-TC capacity)
    return int(min(cap * 3 // 4, 100 * 1024 * 1024))


def _choose_tile_h(ho, wo, cin, coutp, budget_bytes):
    """Largest row tile whose per-step working set fits the VMEM budget."""
    wp = _round_up(wo + _CL + 1, 8)
    best = 1
    for th in (1, 2, 4, 8, 12, 16, 24, 32, 48, 64):
        if th > ho:
            break
        est = (
            2 * (th + 3) * (wo + 1) * 4 * cin * 2      # phase-input block (double-buffered)
            + 2 * th * wo * coutp * 2                  # bf16 output block (double-buffered)
            + ((th + 2) * wp + 2 * _CL) * coutp * 2    # flat conv2 scratch (bf16)
            + 2 * (th + 2) * wo * 9 * cin * 2          # conv1 im2col patch (+ concat temp)
            + (th + 2) * wo * 2 * coutp * 4            # conv1+downsample f32 accumulator
            + 2 * th * wp * coutp * 4                  # conv2 f32 accumulator (+ temps)
            + 4 * (9 * cin * 2 * coutp + 9 * coutp * coutp) * 2  # weights (double-buffered)
        )
        if est <= budget_bytes:
            best = th
    return best


def _make_kernel(*, th, wo, ho, cin, coutp, wp):
    m1 = (th + 2) * wo          # conv1 rows per tile (incl. 2 recomputed halo rows)
    m2 = th * wp                # conv2 accumulator rows (incl. junk columns)

    def kernel(xt_ref, w1c_ref, b1c_ref, w2_ref, b2_ref, o_ref, hp_ref):
        r0 = pl.program_id(1) * th          # first output row of this tile
        xt = xt_ref[0]                      # (th+3, wo+1, 4*cin) phase-split input

        # ---- conv1 (3x3/s2/p1) fused with the 1x1/s2 downsample: one matmul ----
        taps = []
        for kh in range(3):
            a, rr = (1, 0) if kh == 1 else (0, kh // 2)
            for kw in range(3):
                b, cc = (1, 0) if kw == 1 else (0, kw // 2)
                p = a * 2 + b
                ph = xt[:, :, p * cin:(p + 1) * cin]
                taps.append(ph[rr:rr + th + 2, cc:cc + wo, :])
        patch1 = jnp.concatenate(taps, axis=-1).reshape(m1, 9 * cin)

        acc1 = jnp.dot(patch1, w1c_ref[...],
                       preferred_element_type=jnp.float32) + b1c_ref[...]
        # identity (downsample) for the th real rows of this tile, kept in bf16
        iden = acc1[wo:(th + 1) * wo, coutp:].astype(jnp.bfloat16)

        # relu(conv1) for th+2 rows; rows whose global index falls outside
        # [0, ho) must be exactly zero — they are conv2's zero padding.
        h1 = jnp.maximum(acc1[:, :coutp], 0.0).reshape(th + 2, wo, coutp)
        h1 = h1.astype(jnp.bfloat16)

        # ---- stage relu(conv1) in the flat, zero-bordered scratch ---------------
        # hp "row r, col c" of the width-padded image lives at flat row r*wp+_CL+c.
        # The interior is fully rewritten every grid step; only the halo strips
        # (cols _CL-1 and _CL+wo) must be (re)zeroed.  Stale data elsewhere is
        # only ever read into junk accumulator rows that are sliced away.
        zstrip = jnp.zeros((wp - wo, coutp), jnp.bfloat16)
        zero_row = jnp.zeros((wo, coutp), jnp.bfloat16)
        hp_ref[0:_CL, :] = zstrip[:_CL]
        for r in range(th + 2):
            g = r0 + (r - 1)                # global conv1 output row of ext row r
            valid = (g >= 0) & (g < ho)
            hp_ref[r * wp + _CL:r * wp + _CL + wo, :] = jnp.where(valid, h1[r], zero_row)
            hp_ref[r * wp + _CL + wo:(r + 1) * wp + _CL, :] = zstrip

        # ---- conv2 (3x3/s1/p1): 9 accumulating per-tap matmuls ------------------
        # Output pixel (r, c) lives at accumulator row r*wp + c; tap (kh, kw)
        # reads the contiguous flat slab starting at kh*wp + _CL - 1 + kw.
        acc2 = None
        for k in range(9):
            kh, kw = divmod(k, 3)
            off = kh * wp + _CL - 1 + kw
            part = jnp.dot(hp_ref[off:off + m2, :], w2_ref[k],
                           preferred_element_type=jnp.float32)
            acc2 = part if acc2 is None else acc2 + part

        # ---- residual add + relu -------------------------------------------------
        acc2v = acc2.reshape(th, wp, coutp)[:, :wo, :]
        out = jnp.maximum(
            acc2v + iden.reshape(th, wo, coutp) + b2_ref[...].reshape(1, 1, coutp),
            0.0)
        o_ref[0] = out.astype(o_ref.dtype)

    return kernel


def resblock_forward(x_nchw, params, *, tile_h=None):
    """ResBlock forward. x_nchw: (N, Cin, H, W) f32 -> (N, Cout, H/2, W/2) f32."""
    w1, b1, wd, bd, w2, b2 = params
    n, cin, hh, ww = x_nchw.shape
    if hh % 2 or ww % 2:
        raise ValueError("ResBlock Pallas kernel requires even H and W.")
    cout = w1.shape[-1]
    ho, wo = hh // 2, ww // 2
    coutp = _round_up(cout, 128)
    pc = coutp - cout

    vmem_limit = _vmem_limit_bytes()
    if tile_h is None:
        tile_h = _choose_tile_h(ho, wo, cin, coutp, budget_bytes=vmem_limit // 2)
    th = max(1, min(int(tile_h), ho))
    ho_p = _round_up(ho, th)
    nt = ho_p // th
    wp = _round_up(wo + _CL + 1, 8)
    r_hp = _round_up((th + 2) * wp + _CL + 1, 8)

    # ---- weights: pad cout -> coutp (lane-dense), fused / per-tap forms ---------
    w1p = jnp.pad(w1, ((0, 0), (0, 0), (0, 0), (0, pc)))
    wdp = jnp.pad(wd, ((0, 0), (0, 0), (0, 0), (0, pc)))
    w2p = jnp.pad(w2, ((0, 0), (0, 0), (0, pc), (0, pc)))
    b1p = jnp.pad(b1, (0, pc))
    bdp = jnp.pad(bd, (0, pc))
    b2p = jnp.pad(b2, (0, pc))

    w1_col = w1p.reshape(9 * cin, coutp)
    wd_col = jnp.zeros((9 * cin, coutp), w1p.dtype).at[4 * cin:5 * cin, :].set(wdp[0, 0])
    w1c = jnp.concatenate([w1_col, wd_col], axis=1).astype(jnp.bfloat16)
    b1c = jnp.concatenate([b1p, bdp]).reshape(1, 2 * coutp).astype(jnp.float32)
    w2c = w2p.reshape(9, coutp, coutp).astype(jnp.bfloat16)   # per-tap conv2 weights
    b2c = b2p.reshape(1, coutp).astype(jnp.float32)

    # ---- input: NHWC, 1-pad, stride-2 phase split, overlapping row tiles --------
    x_nhwc = jnp.transpose(x_nchw, (0, 2, 3, 1))
    x_p = jnp.pad(x_nhwc, ((0, 0), (1, 1), (1, 1), (0, 0)))
    xph = jnp.concatenate(
        [x_p[:, a::2, b::2, :] for a in (0, 1) for b in (0, 1)], axis=-1
    ).astype(jnp.bfloat16)                                     # (n, ho+1, wo+1, 4*cin)
    xph = jnp.pad(xph, ((0, 0), (1, ho_p - ho + 1), (0, 0), (0, 0)))
    xt = jnp.stack([xph[:, t * th:t * th + th + 3] for t in range(nt)], axis=1)
    xt = xt.reshape(n * nt, th + 3, wo + 1, 4 * cin)

    kernel = _make_kernel(th=th, wo=wo, ho=ho, cin=cin, coutp=coutp, wp=wp)

    out4 = pl.pallas_call(
        kernel,
        out_shape=jax.ShapeDtypeStruct((n * nt, th, wo, coutp), jnp.bfloat16),
        grid=(n, nt),
        in_specs=[
            pl.BlockSpec((1, th + 3, wo + 1, 4 * cin), lambda i, t: (i * nt + t, 0, 0, 0)),
            pl.BlockSpec((9 * cin, 2 * coutp), lambda i, t: (0, 0)),
            pl.BlockSpec((1, 2 * coutp), lambda i, t: (0, 0)),
            pl.BlockSpec((9, coutp, coutp), lambda i, t: (0, 0, 0)),
            pl.BlockSpec((1, coutp), lambda i, t: (0, 0)),
        ],
        out_specs=pl.BlockSpec((1, th, wo, coutp), lambda i, t: (i * nt + t, 0, 0, 0)),
        scratch_shapes=[pltpu.VMEM((r_hp, coutp), jnp.bfloat16)],
        compiler_params=pltpu.CompilerParams(
            dimension_semantics=("parallel", "parallel"),
            vmem_limit_bytes=vmem_limit,
        ),
    )(xt, w1c, b1c, w2c, b2c)

    out = out4.reshape(n, ho_p, wo, coutp)[:, :ho, :, :cout]
    return jnp.transpose(out, (0, 3, 1, 2)).astype(x_nchw.dtype)


def resblock_ref(x_nchw, params):
    """Pure-JAX f32 reference (matches PyTorch semantics)."""
    w1, b1, wd, bd, w2, b2 = params
    x = jnp.transpose(x_nchw, (0, 2, 3, 1))

    def conv(inp, w, b, stride, pad):
        y = lax.conv_general_dilated(
            inp, w, window_strides=(stride, stride),
            padding=[(pad, pad), (pad, pad)],
            dimension_numbers=("NHWC", "HWIO", "NHWC"))
        return y + b

    out = conv(x, w1, b1, 2, 1)
    iden = conv(x, wd, bd, 2, 0)
    out = jax.nn.relu(out)
    out = conv(out, w2, b2, 1, 1)
    out = jax.nn.relu(out + iden)
    return jnp.transpose(out, (0, 3, 1, 2))


if __name__ == "__main__":
    key = jax.random.PRNGKey(0)
    n, cin, cout, hh, ww = 2, 4, 8, 16, 16

    ks = jax.random.split(key, 7)
    x = jax.random.normal(ks[0], (n, cin, hh, ww), jnp.float32)
    # deterministic synthetic parameters (HWIO layout)
    w1 = jax.random.normal(ks[1], (3, 3, cin, cout), jnp.float32) * 0.1
    b1 = jax.random.normal(ks[2], (cout,), jnp.float32) * 0.1
    wd = jax.random.normal(ks[3], (1, 1, cin, cout), jnp.float32) * 0.1
    bd = jax.random.normal(ks[4], (cout,), jnp.float32) * 0.1
    w2 = jax.random.normal(ks[5], (3, 3, cout, cout), jnp.float32) * 0.1
    b2 = jax.random.normal(ks[6], (cout,), jnp.float32) * 0.1
    params = (w1, b1, wd, bd, w2, b2)

    # tile_h=4 -> 2 row tiles per image: exercises the halo-recompute path.
    out = jax.block_until_ready(resblock_forward(x, params, tile_h=4))
    ref = jax.block_until_ready(resblock_ref(x, params))

    assert out.shape == (n, cout, hh // 2, ww // 2), out.shape
    # bf16 matmul operands / bf16 identity+output (f32 accumulation) vs f32 ref.
    err = float(jnp.max(jnp.abs(out - ref)))
    assert jnp.allclose(out, ref, atol=5e-2, rtol=5e-2), err
    print("KERNEL_OK")
</pallas_src>

<mosaic_0001>
module attributes {stable_mosaic.version = 11 : i64} {
  func.func @kernel(%arg0: i32, %arg1: i32, %arg2: memref<1x7x9x16xbf16, #tpu.memory_space<vmem>>, %arg3: memref<36x256xbf16, #tpu.memory_space<vmem>>, %arg4: memref<1x256xf32, #tpu.memory_space<vmem>>, %arg5: memref<9x128x128xbf16, #tpu.memory_space<vmem>>, %arg6: memref<1x128xf32, #tpu.memory_space<vmem>>, %arg7: memref<1x4x8x128xbf16, #tpu.memory_space<vmem>>, %arg8: memref<160x128xbf16, #tpu.memory_space<vmem>>) attributes {dimension_semantics = [#tpu.dimension_semantics<parallel>, #tpu.dimension_semantics<parallel>], iteration_bounds = array<i64: 2, 2>, scalar_prefetch = 0 : i64, scratch_operands = 1 : i64, tpu.core_type = #tpu.core_type<tc>, window_params = [{transform_indices = @transform_0, window_bounds = array<i64: 1, 7, 9, 16>}, {pipeline_mode = #tpu.pipeline_mode<synchronous>, transform_indices = @transform_1, window_bounds = array<i64: 36, 256>}, {pipeline_mode = #tpu.pipeline_mode<synchronous>, transform_indices = @transform_2, window_bounds = array<i64: 1, 256>}, {pipeline_mode = #tpu.pipeline_mode<synchronous>, transform_indices = @transform_3, window_bounds = array<i64: 9, 128, 128>}, {pipeline_mode = #tpu.pipeline_mode<synchronous>, transform_indices = @transform_4, window_bounds = array<i64: 1, 128>}, {transform_indices = @transform_5, window_bounds = array<i64: 1, 4, 8, 128>}]} {
    %c4_i32 = arith.constant 4 : i32
    %0 = arith.muli %arg1, %c4_i32 : i32
    %c0 = arith.constant 0 : index
    %c0_0 = arith.constant 0 : index
    %c0_1 = arith.constant 0 : index
    %c0_2 = arith.constant 0 : index
    %1 = vector.load %arg2[%c0, %c0_0, %c0_1, %c0_2] : memref<1x7x9x16xbf16, #tpu.memory_space<vmem>>, vector<1x7x9x16xbf16>
    %2 = vector.shape_cast %1 : vector<1x7x9x16xbf16> to vector<7x9x16xbf16>
    %3 = vector.extract_strided_slice %2 {offsets = [0, 0, 0], sizes = [7, 9, 4], strides = [1, 1, 1]} : vector<7x9x16xbf16> to vector<7x9x4xbf16>
    %4 = vector.extract_strided_slice %3 {offsets = [0, 0, 0], sizes = [6, 8, 4], strides = [1, 1, 1]} : vector<7x9x4xbf16> to vector<6x8x4xbf16>
    %5 = vector.extract_strided_slice %2 {offsets = [0, 0, 4], sizes = [7, 9, 4], strides = [1, 1, 1]} : vector<7x9x16xbf16> to vector<7x9x4xbf16>
    %6 = vector.extract_strided_slice %5 {offsets = [0, 0, 0], sizes = [6, 8, 4], strides = [1, 1, 1]} : vector<7x9x4xbf16> to vector<6x8x4xbf16>
    %7 = vector.extract_strided_slice %2 {offsets = [0, 0, 0], sizes = [7, 9, 4], strides = [1, 1, 1]} : vector<7x9x16xbf16> to vector<7x9x4xbf16>
    %8 = vector.extract_strided_slice %7 {offsets = [0, 1, 0], sizes = [6, 8, 4], strides = [1, 1, 1]} : vector<7x9x4xbf16> to vector<6x8x4xbf16>
    %9 = vector.extract_strided_slice %2 {offsets = [0, 0, 8], sizes = [7, 9, 4], strides = [1, 1, 1]} : vector<7x9x16xbf16> to vector<7x9x4xbf16>
    %10 = vector.extract_strided_slice %9 {offsets = [0, 0, 0], sizes = [6, 8, 4], strides = [1, 1, 1]} : vector<7x9x4xbf16> to vector<6x8x4xbf16>
    %11 = vector.extract_strided_slice %2 {offsets = [0, 0, 12], sizes = [7, 9, 4], strides = [1, 1, 1]} : vector<7x9x16xbf16> to vector<7x9x4xbf16>
    %12 = vector.extract_strided_slice %11 {offsets = [0, 0, 0], sizes = [6, 8, 4], strides = [1, 1, 1]} : vector<7x9x4xbf16> to vector<6x8x4xbf16>
    %13 = vector.extract_strided_slice %2 {offsets = [0, 0, 8], sizes = [7, 9, 4], strides = [1, 1, 1]} : vector<7x9x16xbf16> to vector<7x9x4xbf16>
    %14 = vector.extract_strided_slice %13 {offsets = [0, 1, 0], sizes = [6, 8, 4], strides = [1, 1, 1]} : vector<7x9x4xbf16> to vector<6x8x4xbf16>
    %15 = vector.extract_strided_slice %2 {offsets = [0, 0, 0], sizes = [7, 9, 4], strides = [1, 1, 1]} : vector<7x9x16xbf16> to vector<7x9x4xbf16>
    %16 = vector.extract_strided_slice %15 {offsets = [1, 0, 0], sizes = [6, 8, 4], strides = [1, 1, 1]} : vector<7x9x4xbf16> to vector<6x8x4xbf16>
    %17 = vector.extract_strided_slice %2 {offsets = [0, 0, 4], sizes = [7, 9, 4], strides = [1, 1, 1]} : vector<7x9x16xbf16> to vector<7x9x4xbf16>
    %18 = vector.extract_strided_slice %17 {offsets = [1, 0, 0], sizes = [6, 8, 4], strides = [1, 1, 1]} : vector<7x9x4xbf16> to vector<6x8x4xbf16>
    %19 = vector.extract_strided_slice %2 {offsets = [0, 0, 0], sizes = [7, 9, 4], strides = [1, 1, 1]} : vector<7x9x16xbf16> to vector<7x9x4xbf16>
    %20 = vector.extract_strided_slice %19 {offsets = [1, 1, 0], sizes = [6, 8, 4], strides = [1, 1, 1]} : vector<7x9x4xbf16> to vector<6x8x4xbf16>
    %21 = tpu.concatenate %4, %6, %8, %10, %12, %14, %16, %18, %20 in 2 : vector<6x8x4xbf16>, vector<6x8x4xbf16>, vector<6x8x4xbf16>, vector<6x8x4xbf16>, vector<6x8x4xbf16>, vector<6x8x4xbf16>, vector<6x8x4xbf16>, vector<6x8x4xbf16>, vector<6x8x4xbf16> -> vector<6x8x36xbf16>
    %22 = vector.shape_cast %21 : vector<6x8x36xbf16> to vector<48x36xbf16>
    %c0_3 = arith.constant 0 : index
    %c0_4 = arith.constant 0 : index
    %23 = vector.load %arg3[%c0_3, %c0_4] : memref<36x256xbf16, #tpu.memory_space<vmem>>, vector<36x256xbf16>
    %cst = arith.constant dense<0.000000e+00> : vector<48x256xf32>
    %24 = tpu.matmul %22, %23, %cst {dimension_numbers = #tpu.dot_dimension_numbers<[1], [0], [0], [1], [0, 0, 1, 1], [], []>} : vector<48x36xbf16>, vector<36x256xbf16>, vector<48x256xf32> -> vector<48x256xf32>
    %c0_5 = arith.constant 0 : index
    %c0_6 = arith.constant 0 : index
    %25 = vector.load %arg4[%c0_5, %c0_6] : memref<1x256xf32, #tpu.memory_space<vmem>>, vector<1x256xf32>
    %26 = vector.broadcast %25 : vector<1x256xf32> to vector<48x256xf32>
    %27 = arith.addf %24, %26 : vector<48x256xf32>
    %28 = vector.extract_strided_slice %27 {offsets = [8, 128], sizes = [32, 128], strides = [1, 1]} : vector<48x256xf32> to vector<32x128xf32>
    %29 = arith.truncf %28 : vector<32x128xf32> to vector<32x128xbf16>
    %30 = vector.extract_strided_slice %27 {offsets = [0, 0], sizes = [48, 128], strides = [1, 1]} : vector<48x256xf32> to vector<48x128xf32>
    %cst_7 = arith.constant 0.000000e+00 : f32
    %31 = vector.broadcast %cst_7 : f32 to vector<48x128xf32>
    %32 = arith.maximumf %30, %31 : vector<48x128xf32>
    %33 = vector.shape_cast %32 : vector<48x128xf32> to vector<6x8x128xf32>
    %34 = arith.truncf %33 : vector<6x8x128xf32> to vector<6x8x128xbf16>
    %cst_8 = arith.constant 0.000000e+00 : bf16
    %35 = vector.broadcast %cst_8 : bf16 to vector<16x128xbf16>
    %cst_9 = arith.constant 0.000000e+00 : bf16
    %36 = vector.broadcast %cst_9 : bf16 to vector<8x128xbf16>
    %37 = vector.extract_strided_slice %35 {offsets = [0, 0], sizes = [8, 128], strides = [1, 1]} : vector<16x128xbf16> to vector<8x128xbf16>
    %c0_10 = arith.constant 0 : index
    %c0_11 = arith.constant 0 : index
    %38 = vector.load %arg8[%c0_10, %c0_11] : memref<160x128xbf16, #tpu.memory_space<vmem>>, vector<8x128xbf16>
    tpu.vector_store %arg8[%c0_10, %c0_11], %37 {strides = array<i32>} : memref<160x128xbf16, #tpu.memory_space<vmem>>, vector<8x128xbf16>,
    %c-1_i32 = arith.constant -1 : i32
    %39 = arith.addi %0, %c-1_i32 : i32
    %c0_i32 = arith.constant 0 : i32
    %40 = arith.cmpi sge, %39, %c0_i32 : i32
    %c8_i32 = arith.constant 8 : i32
    %41 = arith.cmpi slt, %39, %c8_i32 : i32
    %42 = arith.andi %40, %41 : i1
    %43 = vector.extract_strided_slice %34 {offsets = [0, 0, 0], sizes = [1, 8, 128], strides = [1, 1, 1]} : vector<6x8x128xbf16> to vector<1x8x128xbf16>
    %44 = vector.shape_cast %43 : vector<1x8x128xbf16> to vector<8x128xbf16>
    %45 = arith.select %42, %44, %36 : vector<8x128xbf16>
    %c8 = arith.constant 8 : index
    %c0_12 = arith.constant 0 : index
    %46 = vector.load %arg8[%c8, %c0_12] : memref<160x128xbf16, #tpu.memory_space<vmem>>, vector<8x128xbf16>
    tpu.vector_store %arg8[%c8, %c0_12], %45 {strides = array<i32>} : memref<160x128xbf16, #tpu.memory_space<vmem>>, vector<8x128xbf16>,
    %c16 = arith.constant 16 : index
    %c0_13 = arith.constant 0 : index
    %47 = vector.load %arg8[%c16, %c0_13] : memref<160x128xbf16, #tpu.memory_space<vmem>>, vector<16x128xbf16>
    tpu.vector_store %arg8[%c16, %c0_13], %35 {strides = array<i32>} : memref<160x128xbf16, #tpu.memory_space<vmem>>, vector<16x128xbf16>,
    %c0_i32_14 = arith.constant 0 : i32
    %48 = arith.addi %0, %c0_i32_14 : i32
    %c0_i32_15 = arith.constant 0 : i32
    %49 = arith.cmpi sge, %48, %c0_i32_15 : i32
    %c8_i32_16 = arith.constant 8 : i32
    %50 = arith.cmpi slt, %48, %c8_i32_16 : i32
    %51 = arith.andi %49, %50 : i1
    %52 = vector.extract_strided_slice %34 {offsets = [1, 0, 0], sizes = [1, 8, 128], strides = [1, 1, 1]} : vector<6x8x128xbf16> to vector<1x8x128xbf16>
    %53 = vector.shape_cast %52 : vector<1x8x128xbf16> to vector<8x128xbf16>
    %54 = arith.select %51, %53, %36 : vector<8x128xbf16>
    %c32 = arith.constant 32 : index
    %c0_17 = arith.constant 0 : index
    %55 = vector.load %arg8[%c32, %c0_17] : memref<160x128xbf16, #tpu.memory_space<vmem>>, vector<8x128xbf16>
    tpu.vector_store %arg8[%c32, %c0_17], %54 {strides = array<i32>} : memref<160x128xbf16, #tpu.memory_space<vmem>>, vector<8x128xbf16>,
    %c40 = arith.constant 40 : index
    %c0_18 = arith.constant 0 : index
    %56 = vector.load %arg8[%c40, %c0_18] : memref<160x128xbf16, #tpu.memory_space<vmem>>, vector<16x128xbf16>
    tpu.vector_store %arg8[%c40, %c0_18], %35 {strides = array<i32>} : memref<160x128xbf16, #tpu.memory_space<vmem>>, vector<16x128xbf16>,
    %c1_i32 = arith.constant 1 : i32
    %57 = arith.addi %0, %c1_i32 : i32
    %c0_i32_19 = arith.constant 0 : i32
    %58 = arith.cmpi sge, %57, %c0_i32_19 : i32
    %c8_i32_20 = arith.constant 8 : i32
    %59 = arith.cmpi slt, %57, %c8_i32_20 : i32
    %60 = arith.andi %58, %59 : i1
    %61 = vector.extract_strided_slice %34 {offsets = [2, 0, 0], sizes = [1, 8, 128], strides = [1, 1, 1]} : vector<6x8x128xbf16> to vector<1x8x128xbf16>
    %62 = vector.shape_cast %61 : vector<1x8x128xbf16> to vector<8x128xbf16>
    %63 = arith.select %60, %62, %36 : vector<8x128xbf16>
    %c56 = arith.constant 56 : index
    %c0_21 = arith.constant 0 : index
    %64 = vector.load %arg8[%c56, %c0_21] : memref<160x128xbf16, #tpu.memory_space<vmem>>, vector<8x128xbf16>
    tpu.vector_store %arg8[%c56, %c0_21], %63 {strides = array<i32>} : memref<160x128xbf16, #tpu.memory_space<vmem>>, vector<8x128xbf16>,
    %c64 = arith.constant 64 : index
    %c0_22 = arith.constant 0 : index
    %65 = vector.load %arg8[%c64, %c0_22] : memref<160x128xbf16, #tpu.memory_space<vmem>>, vector<16x128xbf16>
    tpu.vector_store %arg8[%c64, %c0_22], %35 {strides = array<i32>} : memref<160x128xbf16, #tpu.memory_space<vmem>>, vector<16x128xbf16>,
    %c2_i32 = arith.constant 2 : i32
    %66 = arith.addi %0, %c2_i32 : i32
    %c0_i32_23 = arith.constant 0 : i32
    %67 = arith.cmpi sge, %66, %c0_i32_23 : i32
    %c8_i32_24 = arith.constant 8 : i32
    %68 = arith.cmpi slt, %66, %c8_i32_24 : i32
    %69 = arith.andi %67, %68 : i1
    %70 = vector.extract_strided_slice %34 {offsets = [3, 0, 0], sizes = [1, 8, 128], strides = [1, 1, 1]} : vector<6x8x128xbf16> to vector<1x8x128xbf16>
    %71 = vector.shape_cast %70 : vector<1x8x128xbf16> to vector<8x128xbf16>
    %72 = arith.select %69, %71, %36 : vector<8x128xbf16>
    %c80 = arith.constant 80 : index
    %c0_25 = arith.constant 0 : index
    %73 = vector.load %arg8[%c80, %c0_25] : memref<160x128xbf16, #tpu.memory_space<vmem>>, vector<8x128xbf16>
    tpu.vector_store %arg8[%c80, %c0_25], %72 {strides = array<i32>} : memref<160x128xbf16, #tpu.memory_space<vmem>>, vector<8x128xbf16>,
    %c88 = arith.constant 88 : index
    %c0_26 = arith.constant 0 : index
    %74 = vector.load %arg8[%c88, %c0_26] : memref<160x128xbf16, #tpu.memory_space<vmem>>, vector<16x128xbf16>
    tpu.vector_store %arg8[%c88, %c0_26], %35 {strides = array<i32>} : memref<160x128xbf16, #tpu.memory_space<vmem>>, vector<16x128xbf16>,
    %c3_i32 = arith.constant 3 : i32
    %75 = arith.addi %0, %c3_i32 : i32
    %c0_i32_27 = arith.constant 0 : i32
    %76 = arith.cmpi sge, %75, %c0_i32_27 : i32
    %c8_i32_28 = arith.constant 8 : i32
    %77 = arith.cmpi slt, %75, %c8_i32_28 : i32
    %78 = arith.andi %76, %77 : i1
    %79 = vector.extract_strided_slice %34 {offsets = [4, 0, 0], sizes = [1, 8, 128], strides = [1, 1, 1]} : vector<6x8x128xbf16> to vector<1x8x128xbf16>
    %80 = vector.shape_cast %79 : vector<1x8x128xbf16> to vector<8x128xbf16>
    %81 = arith.select %78, %80, %36 : vector<8x128xbf16>
    %c104 = arith.constant 104 : index
    %c0_29 = arith.constant 0 : index
    %82 = vector.load %arg8[%c104, %c0_29] : memref<160x128xbf16, #tpu.memory_space<vmem>>, vector<8x128xbf16>
    tpu.vector_store %arg8[%c104, %c0_29], %81 {strides = array<i32>} : memref<160x128xbf16, #tpu.memory_space<vmem>>, vector<8x128xbf16>,
    %c112 = arith.constant 112 : index
    %c0_30 = arith.constant 0 : index
    %83 = vector.load %arg8[%c112, %c0_30] : memref<160x128xbf16, #tpu.memory_space<vmem>>, vector<16x128xbf16>
    tpu.vector_store %arg8[%c112, %c0_30], %35 {strides = array<i32>} : memref<160x128xbf16, #tpu.memory_space<vmem>>, vector<16x128xbf16>,
    %c4_i32_31 = arith.constant 4 : i32
    %84 = arith.addi %0, %c4_i32_31 : i32
    %c0_i32_32 = arith.constant 0 : i32
    %85 = arith.cmpi sge, %84, %c0_i32_32 : i32
    %c8_i32_33 = arith.constant 8 : i32
    %86 = arith.cmpi slt, %84, %c8_i32_33 : i32
    %87 = arith.andi %85, %86 : i1
    %88 = vector.extract_strided_slice %34 {offsets = [5, 0, 0], sizes = [1, 8, 128], strides = [1, 1, 1]} : vector<6x8x128xbf16> to vector<1x8x128xbf16>
    %89 = vector.shape_cast %88 : vector<1x8x128xbf16> to vector<8x128xbf16>
    %90 = arith.select %87, %89, %36 : vector<8x128xbf16>
    %c128 = arith.constant 128 : index
    %c0_34 = arith.constant 0 : index
    %91 = vector.load %arg8[%c128, %c0_34] : memref<160x128xbf16, #tpu.memory_space<vmem>>, vector<8x128xbf16>
    tpu.vector_store %arg8[%c128, %c0_34], %90 {strides = array<i32>} : memref<160x128xbf16, #tpu.memory_space<vmem>>, vector<8x128xbf16>,
    %c136 = arith.constant 136 : index
    %c0_35 = arith.constant 0 : index
    %92 = vector.load %arg8[%c136, %c0_35] : memref<160x128xbf16, #tpu.memory_space<vmem>>, vector<16x128xbf16>
    tpu.vector_store %arg8[%c136, %c0_35], %35 {strides = array<i32>} : memref<160x128xbf16, #tpu.memory_space<vmem>>, vector<16x128xbf16>,
    %c7 = arith.constant 7 : index
    %c0_36 = arith.constant 0 : index
    %93 = vector.load %arg8[%c7, %c0_36] : memref<160x128xbf16, #tpu.memory_space<vmem>>, vector<96x128xbf16>
    %c0_37 = arith.constant 0 : index
    %c0_38 = arith.constant 0 : index
    %c0_39 = arith.constant 0 : index
    %94 = vector.load %arg5[%c0_37, %c0_38, %c0_39] : memref<9x128x128xbf16, #tpu.memory_space<vmem>>, vector<1x128x128xbf16>
    %95 = vector.shape_cast %94 : vector<1x128x128xbf16> to vector<128x128xbf16>
    %cst_40 = arith.constant dense<0.000000e+00> : vector<96x128xf32>
    %96 = tpu.matmul %93, %95, %cst_40 {dimension_numbers = #tpu.dot_dimension_numbers<[1], [0], [0], [1], [0, 0, 1, 1], [], []>} : vector<96x128xbf16>, vector<128x128xbf16>, vector<96x128xf32> -> vector<96x128xf32>
    %c8_41 = arith.constant 8 : index
    %c0_42 = arith.constant 0 : index
    %97 = vector.load %arg8[%c8_41, %c0_42] : memref<160x128xbf16, #tpu.memory_space<vmem>>, vector<96x128xbf16>
    %c1 = arith.constant 1 : index
    %c0_43 = arith.constant 0 : index
    %c0_44 = arith.constant 0 : index
    %98 = vector.load %arg5[%c1, %c0_43, %c0_44] : memref<9x128x128xbf16, #tpu.memory_space<vmem>>, vector<1x128x128xbf16>
    %99 = vector.shape_cast %98 : vector<1x128x128xbf16> to vector<128x128xbf16>
    %cst_45 = arith.constant dense<0.000000e+00> : vector<96x128xf32>
    %100 = tpu.matmul %97, %99, %cst_45 {dimension_numbers = #tpu.dot_dimension_numbers<[1], [0], [0], [1], [0, 0, 1, 1], [], []>} : vector<96x128xbf16>, vector<128x128xbf16>, vector<96x128xf32> -> vector<96x128xf32>
    %101 = arith.addf %96, %100 : vector<96x128xf32>
    %c9 = arith.constant 9 : index
    %c0_46 = arith.constant 0 : index
    %102 = vector.load %arg8[%c9, %c0_46] : memref<160x128xbf16, #tpu.memory_space<vmem>>, vector<96x128xbf16>
    %c2 = arith.constant 2 : index
    %c0_47 = arith.constant 0 : index
    %c0_48 = arith.constant 0 : index
    %103 = vector.load %arg5[%c2, %c0_47, %c0_48] : memref<9x128x128xbf16, #tpu.memory_space<vmem>>, vector<1x128x128xbf16>
    %104 = vector.shape_cast %103 : vector<1x128x128xbf16> to vector<128x128xbf16>
    %cst_49 = arith.constant dense<0.000000e+00> : vector<96x128xf32>
    %105 = tpu.matmul %102, %104, %cst_49 {dimension_numbers = #tpu.dot_dimension_numbers<[1], [0], [0], [1], [0, 0, 1, 1], [], []>} : vector<96x128xbf16>, vector<128x128xbf16>, vector<96x128xf32> -> vector<96x128xf32>
    %106 = arith.addf %101, %105 : vector<96x128xf32>
    %c31 = arith.constant 31 : index
    %c0_50 = arith.constant 0 : index
    %107 = vector.load %arg8[%c31, %c0_50] : memref<160x128xbf16, #tpu.memory_space<vmem>>, vector<96x128xbf16>
    %c3 = arith.constant 3 : index
    %c0_51 = arith.constant 0 : index
    %c0_52 = arith.constant 0 : index
    %108 = vector.load %arg5[%c3, %c0_51, %c0_52] : memref<9x128x128xbf16, #tpu.memory_space<vmem>>, vector<1x128x128xbf16>
    %109 = vector.shape_cast %108 : vector<1x128x128xbf16> to vector<128x128xbf16>
    %cst_53 = arith.constant dense<0.000000e+00> : vector<96x128xf32>
    %110 = tpu.matmul %107, %109, %cst_53 {dimension_numbers = #tpu.dot_dimension_numbers<[1], [0], [0], [1], [0, 0, 1, 1], [], []>} : vector<96x128xbf16>, vector<128x128xbf16>, vector<96x128xf32> -> vector<96x128xf32>
    %111 = arith.addf %106, %110 : vector<96x128xf32>
    %c32_54 = arith.constant 32 : index
    %c0_55 = arith.constant 0 : index
    %112 = vector.load %arg8[%c32_54, %c0_55] : memref<160x128xbf16, #tpu.memory_space<vmem>>, vector<96x128xbf16>
    %c4 = arith.constant 4 : index
    %c0_56 = arith.constant 0 : index
    %c0_57 = arith.constant 0 : index
    %113 = vector.load %arg5[%c4, %c0_56, %c0_57] : memref<9x128x128xbf16, #tpu.memory_space<vmem>>, vector<1x128x128xbf16>
    %114 = vector.shape_cast %113 : vector<1x128x128xbf16> to vector<128x128xbf16>
    %cst_58 = arith.constant dense<0.000000e+00> : vector<96x128xf32>
    %115 = tpu.matmul %112, %114, %cst_58 {dimension_numbers = #tpu.dot_dimension_numbers<[1], [0], [0], [1], [0, 0, 1, 1], [], []>} : vector<96x128xbf16>, vector<128x128xbf16>, vector<96x128xf32> -> vector<96x128xf32>
    %116 = arith.addf %111, %115 : vector<96x128xf32>
    %c33 = arith.constant 33 : index
    %c0_59 = arith.constant 0 : index
    %117 = vector.load %arg8[%c33, %c0_59] : memref<160x128xbf16, #tpu.memory_space<vmem>>, vector<96x128xbf16>
    %c5 = arith.constant 5 : index
    %c0_60 = arith.constant 0 : index
    %c0_61 = arith.constant 0 : index
    %118 = vector.load %arg5[%c5, %c0_60, %c0_61] : memref<9x128x128xbf16, #tpu.memory_space<vmem>>, vector<1x128x128xbf16>
    %119 = vector.shape_cast %118 : vector<1x128x128xbf16> to vector<128x128xbf16>
    %cst_62 = arith.constant dense<0.000000e+00> : vector<96x128xf32>
    %120 = tpu.matmul %117, %119, %cst_62 {dimension_numbers = #tpu.dot_dimension_numbers<[1], [0], [0], [1], [0, 0, 1, 1], [], []>} : vector<96x128xbf16>, vector<128x128xbf16>, vector<96x128xf32> -> vector<96x128xf32>
    %121 = arith.addf %116, %120 : vector<96x128xf32>
    %c55 = arith.constant 55 : index
    %c0_63 = arith.constant 0 : index
    %122 = vector.load %arg8[%c55, %c0_63] : memref<160x128xbf16, #tpu.memory_space<vmem>>, vector<96x128xbf16>
    %c6 = arith.constant 6 : index
    %c0_64 = arith.constant 0 : index
    %c0_65 = arith.constant 0 : index
    %123 = vector.load %arg5[%c6, %c0_64, %c0_65] : memref<9x128x128xbf16, #tpu.memory_space<vmem>>, vector<1x128x128xbf16>
    %124 = vector.shape_cast %123 : vector<1x128x128xbf16> to vector<128x128xbf16>
    %cst_66 = arith.constant dense<0.000000e+00> : vector<96x128xf32>
    %125 = tpu.matmul %122, %124, %cst_66 {dimension_numbers = #tpu.dot_dimension_numbers<[1], [0], [0], [1], [0, 0, 1, 1], [], []>} : vector<96x128xbf16>, vector<128x128xbf16>, vector<96x128xf32> -> vector<96x128xf32>
    %126 = arith.addf %121, %125 : vector<96x128xf32>
    %c56_67 = arith.constant 56 : index
    %c0_68 = arith.constant 0 : index
    %127 = vector.load %arg8[%c56_67, %c0_68] : memref<160x128xbf16, #tpu.memory_space<vmem>>, vector<96x128xbf16>
    %c7_69 = arith.constant 7 : index
    %c0_70 = arith.constant 0 : index
    %c0_71 = arith.constant 0 : index
    %128 = vector.load %arg5[%c7_69, %c0_70, %c0_71] : memref<9x128x128xbf16, #tpu.memory_space<vmem>>, vector<1x128x128xbf16>
    %129 = vector.shape_cast %128 : vector<1x128x128xbf16> to vector<128x128xbf16>
    %cst_72 = arith.constant dense<0.000000e+00> : vector<96x128xf32>
    %130 = tpu.matmul %127, %129, %cst_72 {dimension_numbers = #tpu.dot_dimension_numbers<[1], [0], [0], [1], [0, 0, 1, 1], [], []>} : vector<96x128xbf16>, vector<128x128xbf16>, vector<96x128xf32> -> vector<96x128xf32>
    %131 = arith.addf %126, %130 : vector<96x128xf32>
    %c57 = arith.constant 57 : index
    %c0_73 = arith.constant 0 : index
    %132 = vector.load %arg8[%c57, %c0_73] : memref<160x128xbf16, #tpu.memory_space<vmem>>, vector<96x128xbf16>
    %c8_74 = arith.constant 8 : index
    %c0_75 = arith.constant 0 : index
    %c0_76 = arith.constant 0 : index
    %133 = vector.load %arg5[%c8_74, %c0_75, %c0_76] : memref<9x128x128xbf16, #tpu.memory_space<vmem>>, vector<1x128x128xbf16>
    %134 = vector.shape_cast %133 : vector<1x128x128xbf16> to vector<128x128xbf16>
    %cst_77 = arith.constant dense<0.000000e+00> : vector<96x128xf32>
    %135 = tpu.matmul %132, %134, %cst_77 {dimension_numbers = #tpu.dot_dimension_numbers<[1], [0], [0], [1], [0, 0, 1, 1], [], []>} : vector<96x128xbf16>, vector<128x128xbf16>, vector<96x128xf32> -> vector<96x128xf32>
    %136 = arith.addf %131, %135 : vector<96x128xf32>
    %137 = vector.shape_cast %136 : vector<96x128xf32> to vector<4x24x128xf32>
    %138 = vector.extract_strided_slice %137 {offsets = [0, 0, 0], sizes = [4, 8, 128], strides = [1, 1, 1]} : vector<4x24x128xf32> to vector<4x8x128xf32>
    %139 = vector.shape_cast %29 : vector<32x128xbf16> to vector<4x8x128xbf16>
    %140 = arith.extf %139 : vector<4x8x128xbf16> to vector<4x8x128xf32>
    %141 = arith.addf %138, %140 : vector<4x8x128xf32>
    %c0_78 = arith.constant 0 : index
    %c0_79 = arith.constant 0 : index
    %142 = vector.load %arg6[%c0_78, %c0_79] : memref<1x128xf32, #tpu.memory_space<vmem>>, vector<1x128xf32>
    %143 = vector.shape_cast %142 : vector<1x128xf32> to vector<1x1x128xf32>
    %144 = vector.broadcast %143 : vector<1x1x128xf32> to vector<4x8x128xf32>
    %145 = arith.addf %141, %144 : vector<4x8x128xf32>
    %cst_80 = arith.constant 0.000000e+00 : f32
    %146 = vector.broadcast %cst_80 : f32 to vector<4x8x128xf32>
    %147 = arith.maximumf %145, %146 : vector<4x8x128xf32>
    %148 = arith.truncf %147 : vector<4x8x128xf32> to vector<4x8x128xbf16>
    %c0_81 = arith.constant 0 : index
    %c0_82 = arith.constant 0 : index
    %c0_83 = arith.constant 0 : index
    %c0_84 = arith.constant 0 : index
    %149 = vector.load %arg7[%c0_81, %c0_82, %c0_83, %c0_84] : memref<1x4x8x128xbf16, #tpu.memory_space<vmem>>, vector<1x4x8x128xbf16>
    %150 = vector.shape_cast %149 : vector<1x4x8x128xbf16> to vector<4x8x128xbf16>
    %151 = vector.shape_cast %148 : vector<4x8x128xbf16> to vector<1x4x8x128xbf16>
    tpu.vector_store %arg7[%c0_81, %c0_82, %c0_83, %c0_84], %151 {strides = array<i32>} : memref<1x4x8x128xbf16, #tpu.memory_space<vmem>>, vector<1x4x8x128xbf16>,
    return
  }
  func.func @transform_0(%arg0: i32, %arg1: i32) -> (i32, i32, i32, i32) {
    %c2_i32 = arith.constant 2 : i32
    %0 = arith.muli %arg0, %c2_i32 : i32
    %1 = arith.addi %0, %arg1 : i32
    %c0_i32 = arith.constant 0 : i32
    %c0_i32_0 = arith.constant 0 : i32
    %c0_i32_1 = arith.constant 0 : i32
    %c0_i32_2 = arith.constant 0 : i32
    return %1, %c0_i32, %c0_i32_0, %c0_i32_1 : i32, i32, i32, i32
  }
  func.func @transform_1(%arg0: i32, %arg1: i32) -> (i32, i32) {
    %c0_i32 = arith.constant 0 : i32
    %c0_i32_0 = arith.constant 0 : i32
    %c0_i32_1 = arith.constant 0 : i32
    return %c0_i32, %c0_i32_0 : i32, i32
  }
  func.func @transform_2(%arg0: i32, %arg1: i32) -> (i32, i32) {
    %c0_i32 = arith.constant 0 : i32
    %c0_i32_0 = arith.constant 0 : i32
    %c0_i32_1 = arith.constant 0 : i32
    return %c0_i32, %c0_i32_0 : i32, i32
  }
  func.func @transform_3(%arg0: i32, %arg1: i32) -> (i32, i32, i32) {
    %c0_i32 = arith.constant 0 : i32
    %c0_i32_0 = arith.constant 0 : i32
    %c0_i32_1 = arith.constant 0 : i32
    %c0_i32_2 = arith.constant 0 : i32
    return %c0_i32, %c0_i32_0, %c0_i32_1 : i32, i32, i32
  }
  func.func @transform_4(%arg0: i32, %arg1: i32) -> (i32, i32) {
    %c0_i32 = arith.constant 0 : i32
    %c0_i32_0 = arith.constant 0 : i32
    %c0_i32_1 = arith.constant 0 : i32
    return %c0_i32, %c0_i32_0 : i32, i32
  }
  func.func @transform_5(%arg0: i32, %arg1: i32) -> (i32, i32, i32, i32) {
    %c2_i32 = arith.constant 2 : i32
    %0 = arith.muli %arg0, %c2_i32 : i32
    %1 = arith.addi %0, %arg1 : i32
    %c0_i32 = arith.constant 0 : i32
    %c0_i32_0 = arith.constant 0 : i32
    %c0_i32_1 = arith.constant 0 : i32
    %c0_i32_2 = arith.constant 0 : i32
    return %1, %c0_i32, %c0_i32_0, %c0_i32_1 : i32, i32, i32, i32
  }
}

</mosaic_0001>

<llo_original>
// kernel: tpu_custom_call.1
$region0: #{tpu_custom_call.1}
  #allocation0 [shape = 'u32[]', space=smem, size = 0x4, offset = 0x4, fixed_abs, tag = 'smem constant byte address 0x4 - core index']
  #allocation1 [shape = 'u32[144,128]{1,0:T(1,128)}', space=vmem, size = 0x12000, scoped, tag = 'internal scratch']
  #allocation2 [shape = 'bf16[160,128]{1,0:T(16,128)(2,1)}', space=vmem, size = 0xa000, scoped, tag = 'scratch operand']
  %s0 = inlined_call_operand.vmem [shape: bf16[4,7,9,16], index: 0, kind: input, shape index: {}]
  %s1 = inlined_call_operand.vmem [shape: bf16[36,256], index: 1, kind: input, shape index: {}]
  %s2 = inlined_call_operand.vmem [shape: f32[1,256], index: 2, kind: input, shape index: {}]
  %s3 = inlined_call_operand.hbm [shape: bf16[9,128,128], index: 3, kind: input, shape index: {}]
  %s4 = inlined_call_operand.vmem [shape: f32[1,128], index: 4, kind: input, shape index: {}]
  %s5 = inlined_call_operand.hbm [shape: bf16[4,4,8,128], index: 5, kind: output, shape index: {}]
  %s6 = sld [smem:[#allocation0]]
  $region57: #{tpu_custom_call.1} parent=0
    _
  %s8 = ssub.s32 1, %s6
  %s9 = scalar_select 0, %s8, %s6
  $region1: #{tpu_custom_call.1} parent=0
    #allocation3 [shape = 'u8[294912]{0}', space=vmem, size = 0x48000, scoped, tag = 'input window, operand 3, single buffered']
    #allocation4 [shape = 's32[2]{0}', space=sflag, size = 0x8, scoped, tag = 'scoped memory for tpu_custom_call.1']
    #allocation5 [shape = 's32[2]{0}', space=sflag, size = 0x8, scoped, tag = 'scoped memory for tpu_custom_call.1']
    #allocation6 [shape = 'u8[16384]{0}', space=vmem, size = 0x4000, scoped, tag = 'output window, operand 0']
    %10 = vsyncpa [#allocation4], 0
    %11 = vsyncpa [#allocation5], 0
    %s12 = scalar_lea.sflag [#allocation5], 1
    %13 = vsyncpa %s12, 0
    loop: start=0, step=1, limit=6
    $region2: #{tpu_custom_call.1} parent=1 // loop_pre_header
      _
    $region3: #{tpu_custom_call.1} parent=1 // loop_header
      %s15 = sphi 0, %s19
      %p16 = scmp.ge.s32.totalorder %s15, 6
      %s22 = sphi 0, %s34
      %s23 = sphi 0, %s30
      %s24 = sphi 0, %s22
      %s25 = sphi 0, %s23
      %s26 = sphi 0, %s24
      %s27 = sphi 0, %s25
      %s41 = sphi 0, %s43
      %s44 = sphi 0, %s41
      %s45 = sphi 0, %s44
      %s61 = sphi 0, %s45
      %s65 = sphi 0, %s65
      %s67 = sphi 0, %s65
      %s68 = sphi 0, %s67
      %s82 = sphi 0, %s68
      %s86 = sphi 0, %s86
      %s88 = sphi 0, %s86
      %s89 = sphi 0, %s88
      %s103 = sphi 0, %s89
      %s107 = sphi 0, %s107
      %s109 = sphi 0, %s107
      %s110 = sphi 0, %s109
      %s124 = sphi 0, %s110
      %s128 = sphi 0, %s128
      %s130 = sphi 0, %s128
      %s131 = sphi 0, %s130
      %s145 = sphi 0, %s131
      %s155 = sphi 0, %s157
      %s158 = sphi 0, %s155
      %s159 = sphi 0, %s158
      %s175 = sphi 0, %s159
    $region4: #{tpu_custom_call.1} parent=1 // loop_header_branch
      %18 = sbr.rel (%p16) target = $region8
    $region5: #{tpu_custom_call.1} parent=1 // loop_body
      %s20 = ssub.s32 %s15, 1
      %s21 = ssub.s32 %s15, 2
      %s28 = sadd.s32 1, %s23
      %p29 = scmp.ge.s32.totalorder %s28, 2
      %s30 = scalar_select %p29, 0, %s28
      %s31 = sadd.s32 1, %s22
      %s32 = scalar_select %p29, %s31, %s22
      %p33 = scmp.ge.s32.totalorder %s32, 2
      %s34 = scalar_select %p33, 0, %s32
      %s35 = smul.u32 %s22, 2
      %s36 = sadd.s32 %s35, %s23
      %s37 = smul.u32 %s34, 2
      %s38 = sadd.s32 %s37, %s30
      %s39 = ssub.s32 %s36, %s38
      %p40 = scmp.eq.s32.totalorder %s39, 0
      %s42 = sadd.s32 %s41, 1
      %s43 = scalar_select %p40, %s41, %s42
      %p46 = pneg %p40
      %p47 = scmp.eq.s32.totalorder %s15, 3
      %p48 = por %p46, %p47
      %p49 = scmp.ne.s32.totalorder %s41, %s44
      %p50 = scmp.eq.s32.totalorder %s15, 0
      %p51 = por %p49, %p50
      %p52 = scmp.ne.s32.totalorder %s41, %s44
      %p53 = scmp.eq.s32.totalorder %s20, 3
      %p54 = por %p52, %p53
      %p55 = scmp.ne.s32.totalorder %s44, %s45
      %p56 = scmp.eq.s32.totalorder %s20, 0
      %p57 = por %p55, %p56
      %p58 = scmp.ne.s32.totalorder %s44, %s45
      %p59 = scmp.eq.s32.totalorder %s21, 3
      %p60 = por %p58, %p59
      %p62 = scmp.ne.s32.totalorder %s45, %s61
      %p63 = scmp.eq.s32.totalorder %s21, 0
      %p64 = por %p62, %p63
      %s66 = sadd.s32 %s65, 1
      %p69 = scmp.eq.s32.totalorder %s15, 3
      %p70 = scmp.ne.s32.totalorder %s65, %s67
      %p71 = scmp.eq.s32.totalorder %s15, 0
      %p72 = por %p70, %p71
      %p73 = scmp.ne.s32.totalorder %s65, %s67
      %p74 = scmp.eq.s32.totalorder %s20, 3
      %p75 = por %p73, %p74
      %p76 = scmp.ne.s32.totalorder %s67, %s68
      %p77 = scmp.eq.s32.totalorder %s20, 0
      %p78 = por %p76, %p77
      %p79 = scmp.ne.s32.totalorder %s67, %s68
      %p80 = scmp.eq.s32.totalorder %s21, 3
      %p81 = por %p79, %p80
      %p83 = scmp.ne.s32.totalorder %s68, %s82
      %p84 = scmp.eq.s32.totalorder %s21, 0
      %p85 = por %p83, %p84
      %s87 = sadd.s32 %s86, 1
      %p90 = scmp.eq.s32.totalorder %s15, 3
      %p91 = scmp.ne.s32.totalorder %s86, %s88
      %p92 = scmp.eq.s32.totalorder %s15, 0
      %p93 = por %p91, %p92
      %p94 = scmp.ne.s32.totalorder %s86, %s88
      %p95 = scmp.eq.s32.totalorder %s20, 3
      %p96 = por %p94, %p95
      %p97 = scmp.ne.s32.totalorder %s88, %s89
      %p98 = scmp.eq.s32.totalorder %s20, 0
      %p99 = por %p97, %p98
      %p100 = scmp.ne.s32.totalorder %s88, %s89
      %p101 = scmp.eq.s32.totalorder %s21, 3
      %p102 = por %p100, %p101
      %p104 = scmp.ne.s32.totalorder %s89, %s103
      %p105 = scmp.eq.s32.totalorder %s21, 0
      %p106 = por %p104, %p105
      %s108 = sadd.s32 %s107, 1
      %p111 = scmp.eq.s32.totalorder %s15, 3
      %p112 = scmp.ne.s32.totalorder %s107, %s109
      %p113 = scmp.eq.s32.totalorder %s15, 0
      %p114 = por %p112, %p113
      %p115 = scmp.ne.s32.totalorder %s107, %s109
      %p116 = scmp.eq.s32.totalorder %s20, 3
      %p117 = por %p115, %p116
      %p118 = scmp.ne.s32.totalorder %s109, %s110
      %p119 = scmp.eq.s32.totalorder %s20, 0
      %p120 = por %p118, %p119
      %p121 = scmp.ne.s32.totalorder %s109, %s110
      %p122 = scmp.eq.s32.totalorder %s21, 3
      %p123 = por %p121, %p122
      %p125 = scmp.ne.s32.totalorder %s110, %s124
      %p126 = scmp.eq.s32.totalorder %s21, 0
      %p127 = por %p125, %p126
      %s129 = sadd.s32 %s128, 1
      %p132 = scmp.eq.s32.totalorder %s15, 3
      %p133 = scmp.ne.s32.totalorder %s128, %s130
      %p134 = scmp.eq.s32.totalorder %s15, 0
      %p135 = por %p133, %p134
      %p136 = scmp.ne.s32.totalorder %s128, %s130
      %p137 = scmp.eq.s32.totalorder %s20, 3
      %p138 = por %p136, %p137
      %p139 = scmp.ne.s32.totalorder %s130, %s131
      %p140 = scmp.eq.s32.totalorder %s20, 0
      %p141 = por %p139, %p140
      %p142 = scmp.ne.s32.totalorder %s130, %s131
      %p143 = scmp.eq.s32.totalorder %s21, 3
      %p144 = por %p142, %p143
      %p146 = scmp.ne.s32.totalorder %s131, %s145
      %p147 = scmp.eq.s32.totalorder %s21, 0
      %p148 = por %p146, %p147
      %s149 = smul.u32 %s22, 2
      %s150 = sadd.s32 %s149, %s23
      %s151 = smul.u32 %s34, 2
      %s152 = sadd.s32 %s151, %s30
      %s153 = ssub.s32 %s150, %s152
      %p154 = scmp.eq.s32.totalorder %s153, 0
      %s156 = sadd.s32 %s155, 1
      %s157 = scalar_select %p154, %s155, %s156
      %p160 = pneg %p154
      %p161 = scmp.eq.s32.totalorder %s15, 3
      %p162 = por %p160, %p161
      %p163 = scmp.ne.s32.totalorder %s155, %s158
      %p164 = scmp.eq.s32.totalorder %s15, 0
      %p165 = por %p163, %p164
      %p166 = scmp.ne.s32.totalorder %s155, %s158
      %p167 = scmp.eq.s32.totalorder %s20, 3
      %p168 = por %p166, %p167
      %p169 = scmp.ne.s32.totalorder %s158, %s159
      %p170 = scmp.eq.s32.totalorder %s20, 0
      %p171 = por %p169, %p170
      %p172 = scmp.ne.s32.totalorder %s158, %s159
      %p173 = scmp.eq.s32.totalorder %s21, 3
      %p174 = por %p172, %p173
      %p176 = scmp.ne.s32.totalorder %s159, %s175
      %p177 = scmp.eq.s32.totalorder %s21, 0
      %p178 = por %p176, %p177
      %p179 = scmp.le.s32.totalorder 1, %s15
      %p180 = scmp.lt.s32.totalorder %s15, 5
      %p181 = pnand %p179, %p180
      %p182 = pneg %p181
      // Predicated region
      $region9: #{tpu_custom_call.1} parent=5 // pred_check
        _
      $region10: #{tpu_custom_call.1} parent=5 // pred_check_branch
        %184 = sbr.rel (%p181) target = $region12
      $region11: #{tpu_custom_call.1} parent=5 // pred_region
        %s185 = ssub.s32 %s15, 1
        // Predicated region
        $region13: #{tpu_custom_call.1} parent=11 // pred_check
          %p186 = pneg %p78
        $region14: #{tpu_custom_call.1} parent=11 // pred_check_branch
          %188 = sbr.rel (%p186) target = $region16
        $region15: #{tpu_custom_call.1} parent=11 // pred_region
          _
        $region16: #{tpu_custom_call.1} parent=11 // pred_fallthru
          _
        // Predicated region
        $region17: #{tpu_custom_call.1} parent=11 // pred_check
          %p189 = pneg %p99
        $region18: #{tpu_custom_call.1} parent=11 // pred_check_branch
          %191 = sbr.rel (%p189) target = $region20
        $region19: #{tpu_custom_call.1} parent=11 // pred_region
          _
        $region20: #{tpu_custom_call.1} parent=11 // pred_fallthru
          _
        // Predicated region
        $region21: #{tpu_custom_call.1} parent=11 // pred_check
          %p192 = pneg %p120
        $region22: #{tpu_custom_call.1} parent=11 // pred_check_branch
          %194 = sbr.rel (%p192) target = $region24
        $region23: #{tpu_custom_call.1} parent=11 // pred_region
          %s196 = ssub.s32 9216, 9216
          %197 = vsyncadd [#allocation4], %s196
          %s198 = sshll.u32 [#allocation3], 4
          %s199 = int_to_ptr.vmem [resolvable:$true] %s198
          %204 = dma.hbm_to_vmem [thread:$0]  %s3, 9216, %s199, [#allocation4], 64, 64, 4
        $region24: #{tpu_custom_call.1} parent=11 // pred_fallthru
          _
        // Predicated region
        $region25: #{tpu_custom_call.1} parent=11 // pred_check
          %p205 = pneg %p141
        $region26: #{tpu_custom_call.1} parent=11 // pred_check_branch
          %207 = sbr.rel (%p205) target = $region28
        $region27: #{tpu_custom_call.1} parent=11 // pred_region
          _
        $region28: #{tpu_custom_call.1} parent=11 // pred_fallthru
          _
      $region12: #{tpu_custom_call.1} parent=5 // pred_fallthru
        _
      %p208 = scmp.lt.s32.totalorder %s15, 4
      // Predicated region
      $region29: #{tpu_custom_call.1} parent=5 // pred_check
        %p209 = pneg %p208
      $region30: #{tpu_custom_call.1} parent=5 // pred_check_branch
        %211 = sbr.rel (%p209) target = $region32
      $region31: #{tpu_custom_call.1} parent=5 // pred_region
        // Predicated region
        $region33: #{tpu_custom_call.1} parent=31 // pred_check
          %p212 = pneg %p51
        $region34: #{tpu_custom_call.1} parent=31 // pred_check_branch
          %214 = sbr.rel (%p212) target = $region36
        $region35: #{tpu_custom_call.1} parent=31 // pred_region
          %s215 = smul.u32 %s22, 2
          %s216 = sadd.s32 %s215, %s23
          %p217 = scmp.lt.s32.totalorder %s216, 3
          %s218 = scalar_select %p217, %s216, 3
          %s219 = smul.addr %s218, 14
          %s220 = smul.addr %s219, 4
          %s221 = scalar_lea.vmem %s0, %s220
          %s222 = smul.u32 %s22, 2
          %s223 = sadd.s32 %s222, %s23
        $region36: #{tpu_custom_call.1} parent=31 // pred_fallthru
          _
      $region32: #{tpu_custom_call.1} parent=5 // pred_fallthru
        _
      %p224 = scmp.le.s32.totalorder 1, %s15
      %p225 = scmp.lt.s32.totalorder %s15, 5
      %p226 = pnand %p224, %p225
      %p227 = pneg %p226
      // Predicated region
      $region37: #{tpu_custom_call.1} parent=5 // pred_check
        _
      $region38: #{tpu_custom_call.1} parent=5 // pred_check_branch
        %229 = sbr.rel (%p226) target = $region40
      $region39: #{tpu_custom_call.1} parent=5 // pred_region
        %s230 = ssub.s32 %s15, 1
        // Predicated region
        $region41: #{tpu_custom_call.1} parent=39 // pred_check
          %p231 = pneg %p120
        $region42: #{tpu_custom_call.1} parent=39 // pred_check_branch
          %233 = sbr.rel (%p231) target = $region44
        $region43: #{tpu_custom_call.1} parent=39 // pred_region
          %234 = dma.done [#allocation4], 9216
        $region44: #{tpu_custom_call.1} parent=39 // pred_fallthru
          _
        %s235 = smul.u32 %s24, 2
        %s236 = sadd.s32 %s235, %s25
        %p237 = scmp.lt.s32.totalorder %s236, 3
        %s238 = scalar_select %p237, %s236, 3
        %s239 = smul.addr %s238, 14
        %s240 = smul.addr %s239, 4
        %s241 = scalar_lea.vmem %s0, %s240
        %p242 = pneg %p57
        %p243 = pneg %p54
        %p244 = pneg %p78
        %p245 = pneg %p75
        %p246 = pneg %p99
        %p247 = pneg %p96
        %p248 = pneg %p120
        %p249 = pneg %p117
        %p250 = pneg %p141
        %p251 = pneg %p138
        %p252 = pneg %p171
        %p253 = pneg %p168
        %s254 = sand.u32 %s158, 1
        %s255 = scalar_lea.sflag [#allocation5], %s254
        %s256 = sand.u32 %s158, 1
        %s257 = smul.addr %s256, 16
        %s258 = scalar_lea.vmem [#allocation6], %s257
        %s259 = smul.u32 %s24, 2
        %s260 = sadd.s32 %s259, %s25
        %p261 = scmp.lt.s32.totalorder %s260, 3
        %s262 = scalar_select %p261, %s260, 3
        %s263 = smul.addr %s262, 14
        %s264 = smul.addr %s263, 4
        %s265 = scalar_lea.vmem %s0, %s264
        %s266 = smul.u32 %s24, 2
        %s267 = sadd.s32 %s266, %s25
        %s268 = smul.u32 %s24, 2
        %s269 = sadd.s32 %s268, %s25
        %s271 = smul.u32 %s25, 4
        %v272 = vld [vmem:[%s265] sm:$0xf]
        %v273 = vld [vmem:[%s265 + $0x4] sm:$0x1]
        %v274 = vld [vmem:[%s265 + $0x8] sm:$0xf]
        %v275 = vld [vmem:[%s265 + $0xc] sm:$0x1]
        %v276 = vld [vmem:[%s265 + $0x10] sm:$0xf]
        %v277 = vld [vmem:[%s265 + $0x14] sm:$0x1]
        %v278 = vld [vmem:[%s265 + $0x18] sm:$0xf]
        %v279 = vld [vmem:[%s265 + $0x1c] sm:$0x1]
        %v280 = vld [vmem:[%s265 + $0x20] sm:$0xf]
        %v281 = vld [vmem:[%s265 + $0x24] sm:$0x1]
        %v282 = vld [vmem:[%s265 + $0x28] sm:$0xf]
        %v283 = vld [vmem:[%s265 + $0x2c] sm:$0x1]
        %v284 = vld [vmem:[%s265 + $0x30] sm:$0xf]
        %v285 = vld [vmem:[%s265 + $0x34] sm:$0x1]
        %v298 = vunpack.c.l.b16 %v272
        %v299 = vunpack.c.l.b16 %v273
        %v300 = vunpack.c.l.b16 %v274
        %v301 = vunpack.c.l.b16 %v275
        %v302 = vunpack.c.l.b16 %v276
        %v303 = vunpack.c.l.b16 %v277
        %v304 = vunpack.c.l.b16 %v278
        %v305 = vunpack.c.l.b16 %v279
        %v306 = vunpack.c.l.b16 %v280
        %v307 = vunpack.c.l.b16 %v281
        %v308 = vunpack.c.l.b16 %v282
        %v309 = vunpack.c.l.b16 %v283
        %v310 = vpack.c.b16 %v299, %v298
        %v311 = vpack.c.b16 %v301, %v300
        %v312 = vpack.c.b16 %v303, %v302
        %v313 = vpack.c.b16 %v305, %v304
        %v314 = vpack.c.b16 %v307, %v306
        %v315 = vpack.c.b16 %v309, %v308
        %v317 = vshrl.u32 %v310, 16
        %v319 = vshll.u32 %v310, 16
        %v321 = vrot.slane %v319, 1
        %v322 = vor.u32 %v317, %v321
        %v324 = vshrl.u32 %v311, 16
        %v326 = vshll.u32 %v311, 16
        %v328 = vrot.slane %v326, 1
        %v329 = vor.u32 %v324, %v328
        %v331 = vshrl.u32 %v312, 16
        %v333 = vshll.u32 %v312, 16
        %v335 = vrot.slane %v333, 1
        %v336 = vor.u32 %v331, %v335
        %v338 = vshrl.u32 %v313, 16
        %v340 = vshll.u32 %v313, 16
        %v342 = vrot.slane %v340, 1
        %v343 = vor.u32 %v338, %v342
        %v345 = vshrl.u32 %v314, 16
        %v347 = vshll.u32 %v314, 16
        %v349 = vrot.slane %v347, 1
        %v350 = vor.u32 %v345, %v349
        %v352 = vshrl.u32 %v315, 16
        %v354 = vshll.u32 %v315, 16
        %v356 = vrot.slane %v354, 1
        %v357 = vor.u32 %v352, %v356
        %358 = vrot.lane.b32.xlu0 %v322, 8
        %v359 = vpop.permute.xlu0 %358
        %360 = vrot.lane.b32.xlu0 %v329, 8
        %v361 = vpop.permute.xlu0 %360
        %362 = vrot.lane.b32.xlu0 %v336, 8
        %v363 = vpop.permute.xlu0 %362
        %364 = vrot.lane.b32.xlu0 %v343, 8
        %v365 = vpop.permute.xlu0 %364
        %366 = vrot.lane.b32.xlu0 %v350, 8
        %v367 = vpop.permute.xlu0 %366
        %368 = vrot.lane.b32.xlu0 %v357, 8
        %v369 = vpop.permute.xlu0 %368
        %v370 = vpack.c.b16 %v298, %v298
        %v371 = vpack.c.b16 %v300, %v300
        %v372 = vpack.c.b16 %v302, %v302
        %v373 = vpack.c.b16 %v304, %v304
        %v374 = vpack.c.b16 %v306, %v306
        %v375 = vpack.c.b16 %v308, %v308
        %376 = vrot.lane.b32.xlu0 %v370, 4
        %v377 = vpop.permute.xlu0 %376
        %378 = vrot.lane.b32.xlu0 %v371, 4
        %v379 = vpop.permute.xlu0 %378
        %380 = vrot.lane.b32.xlu0 %v372, 4
        %v381 = vpop.permute.xlu0 %380
        %382 = vrot.lane.b32.xlu0 %v373, 4
        %v383 = vpop.permute.xlu0 %382
        %384 = vrot.lane.b32.xlu0 %v374, 4
        %v385 = vpop.permute.xlu0 %384
        %386 = vrot.lane.b32.xlu0 %v375, 4
        %v387 = vpop.permute.xlu0 %386
        %388 = vrot.lane.b32.xlu0 %v322, 12
        %v389 = vpop.permute.xlu0 %388
        %390 = vrot.lane.b32.xlu0 %v329, 12
        %v391 = vpop.permute.xlu0 %390
        %392 = vrot.lane.b32.xlu0 %v336, 12
        %v393 = vpop.permute.xlu0 %392
        %394 = vrot.lane.b32.xlu0 %v343, 12
        %v395 = vpop.permute.xlu0 %394
        %396 = vrot.lane.b32.xlu0 %v350, 12
        %v397 = vpop.permute.xlu0 %396
        %398 = vrot.lane.b32.xlu0 %v357, 12
        %v399 = vpop.permute.xlu0 %398
        %v401 = vunpack.c.l.b16 %v284
        %v402 = vpack.c.b16 %v401, %v401
        %403 = vrot.lane.b32.xlu0 %v371, 24
        %v404 = vpop.permute.xlu0 %403
        %405 = vrot.lane.b32.xlu0 %v372, 24
        %v406 = vpop.permute.xlu0 %405
        %407 = vrot.lane.b32.xlu0 %v373, 24
        %v408 = vpop.permute.xlu0 %407
        %409 = vrot.lane.b32.xlu0 %v374, 24
        %v410 = vpop.permute.xlu0 %409
        %411 = vrot.lane.b32.xlu0 %v375, 24
        %v412 = vpop.permute.xlu0 %411
        %413 = vrot.lane.b32.xlu0 %v402, 24
        %v414 = vpop.permute.xlu0 %413
        %v416 = vunpack.c.l.b16 %v285
        %v417 = vpack.c.b16 %v416, %v401
        %v419 = vshrl.u32 %v417, 16
        %v421 = vshll.u32 %v417, 16
        %v423 = vrot.slane %v421, 1
        %v424 = vor.u32 %v419, %v423
        %425 = vrot.lane.b32.xlu0 %v329, 32
        %v426 = vpop.permute.xlu0 %425
        %427 = vrot.lane.b32.xlu0 %v336, 32
        %v428 = vpop.permute.xlu0 %427
        %429 = vrot.lane.b32.xlu0 %v343, 32
        %v430 = vpop.permute.xlu0 %429
        %431 = vrot.lane.b32.xlu0 %v350, 32
        %v432 = vpop.permute.xlu0 %431
        %433 = vrot.lane.b32.xlu0 %v357, 32
        %v434 = vpop.permute.xlu0 %433
        %435 = vrot.lane.b32.xlu0 %v424, 32
        %v436 = vpop.permute.xlu0 %435
        %vm443 = vcmask 64512
        %v445 = vsel %vm443, %v272, %v359
        %v447 = vsel %vm443, %v274, %v361
        %v449 = vsel %vm443, %v276, %v363
        %v451 = vsel %vm443, %v278, %v365
        %v453 = vsel %vm443, %v280, %v367
        %v455 = vsel %vm443, %v282, %v369
        %vm456 = vcmask 97280
        %v458 = vsel %vm456, %v445, %v377
        %v460 = vsel %vm456, %v447, %v379
        %v462 = vsel %vm456, %v449, %v381
        %v464 = vsel %vm456, %v451, %v383
        %v466 = vsel %vm456, %v453, %v385
        %v468 = vsel %vm456, %v455, %v387
        %vm469 = vcmask 130048
        %v470 = vsel %vm469, %v458, %v377
        %v471 = vsel %vm469, %v460, %v379
        %v472 = vsel %vm469, %v462, %v381
        %v473 = vsel %vm469, %v464, %v383
        %v474 = vsel %vm469, %v466, %v385
        %v475 = vsel %vm469, %v468, %v387
        %vm476 = vcmask 162816
        %v478 = vsel %vm476, %v470, %v389
        %v480 = vsel %vm476, %v471, %v391
        %v482 = vsel %vm476, %v472, %v393
        %v484 = vsel %vm476, %v473, %v395
        %v486 = vsel %vm476, %v474, %v397
        %v488 = vsel %vm476, %v475, %v399
        %vm489 = vcmask 195584
        %v491 = vsel %vm489, %v478, %v404
        %v493 = vsel %vm489, %v480, %v406
        %v495 = vsel %vm489, %v482, %v408
        %v497 = vsel %vm489, %v484, %v410
        %v499 = vsel %vm489, %v486, %v412
        %v501 = vsel %vm489, %v488, %v414
        %vm502 = vcmask 228352
        %v503 = vsel %vm502, %v491, %v404
        %v504 = vsel %vm502, %v493, %v406
        %v505 = vsel %vm502, %v495, %v408
        %v506 = vsel %vm502, %v497, %v410
        %v507 = vsel %vm502, %v499, %v412
        %v508 = vsel %vm502, %v501, %v414
        %vm509 = vcmask 261120
        %v511 = vsel %vm509, %v503, %v426
        %v513 = vsel %vm509, %v504, %v428
        %v515 = vsel %vm509, %v505, %v430
        %v517 = vsel %vm509, %v506, %v432
        %v519 = vsel %vm509, %v507, %v434
        %v521 = vsel %vm509, %v508, %v436
        %v522 = vld [vmem:[%s1] sm:$0xff]
        %v523 = vld [vmem:[%s1 + $0x8] sm:$0xff]
        %v524 = vld [vmem:[%s1 + $0x10] sm:$0xff]
        %v525 = vld [vmem:[%s1 + $0x18] sm:$0xff]
        %v526 = vld [vmem:[%s1 + $0x20] sm:$0x33]
        %v527 = vld [vmem:[%s2] sm:$0x3]
        %v529 = vlaneseq
        %v530 = vshrl.u32 %v529, 7
        %v531 = vsub.s32 0, %v530
        %v532 = vrot.slane %v527, %v531
        %v533 = vlaneseq
        %v534 = vshrl.u32 %v533, 7
        %v535 = vsub.s32 1, %v534
        %v536 = vrot.slane %v527, %v535
        %v545 = vunpack.c.l.b16 %v511
        %v546 = vunpack.c.l.b16 %v513
        %v547 = vunpack.c.l.b16 %v515
        %v548 = vunpack.c.l.b16 %v517
        %v549 = vunpack.c.l.b16 %v519
        %v550 = vunpack.c.l.b16 %v521
        %v551 = vpack.c.b16 %v546, %v545
        %v552 = vpack.c.b16 %v548, %v547
        %v553 = vpack.c.b16 %v550, %v549
        %v559 = vunpack.c.l.b16 %v522
        %v560 = vunpack.c.h.b16 %v522
        %v561 = vunpack.c.l.b16 %v523
        %v562 = vunpack.c.h.b16 %v523
        %v563 = vunpack.c.l.b16 %v524
        %v564 = vunpack.c.h.b16 %v524
        %v565 = vunpack.c.l.b16 %v525
        %v566 = vunpack.c.h.b16 %v525
        %v567 = vunpack.c.l.b16 %v526
        %v568 = vunpack.c.h.b16 %v526
        %v569 = vpack.c.b16 %v561, %v559
        %v570 = vpack.c.b16 %v562, %v560
        %v571 = vpack.c.b16 %v565, %v563
        %v572 = vpack.c.b16 %v566, %v564
        %v573 = vpack.c.b16 %v567, %v567
        %v574 = vpack.c.b16 %v568, %v568
        %vm579 = vcmask 293888
        %v581 = vsel %vm579, %v551, 0
        %v584 = vsel %vm579, %v552, 0
        %v587 = vsel %vm579, %v553, 0
        %vm589 = vcmask 1041408
        %v591 = vsel %vm589, %v573, 0
        %v594 = vsel %vm589, %v574, 0
        %596 = vmatprep.subr.bf16.mxu0 %v570
        %597 = vmatpush1.bf16.msra.mxu0 %v569
        %598 = vmatprep.subr.bf16.mxu0 %v572
        %599 = vmatpush1.bf16.msra.mxu0 %v571
        %600 = vmatprep.subr.bf16.mxu0 %v594
        %601 = vmatpush1.bf16.msra.mxu0 %v591
        %602 = vmatprep.subr.bf16.mxu0 0
        %603 = vmatpush1.bf16.msra.mxu0 0
        %604 = vmatprep.subr.bf16.mxu0 0
        %605 = vmatpush1.bf16.msra.mxu0 0
        %606 = vmatprep.subr.bf16.mxu0 0
        %607 = vmatpush1.bf16.msra.mxu0 0
        %608 = vmatprep.subr.bf16.mxu0 0
        %609 = vmatpush1.bf16.msra.mxu0 0
        %610 = vmatprep.subr.bf16.mxu0 0
        %611 = vmatpush1.bf16.msra.mxu0 0
        %612 = vmatprep.subr.bf16.mxu0 0
        %613 = vmatpush1.bf16.msra.mxu0 0
        %614 = vmatprep.subr.bf16.mxu0 0
        %615 = vmatpush1.bf16.msra.mxu0 0
        %616 = vmatprep.subr.bf16.mxu0 0
        %617 = vmatpush1.bf16.msra.mxu0 0
        %618 = vmatprep.subr.bf16.mxu0 0
        %619 = vmatpush1.bf16.msra.mxu0 0
        %620 = vmatprep.subr.bf16.mxu0 0
        %621 = vmatpush1.bf16.msra.mxu0 0
        %622 = vmatprep.subr.bf16.mxu0 0
        %623 = vmatpush1.bf16.msra.mxu0 0
        %624 = vmatprep.subr.bf16.mxu0 0
        %625 = vmatpush1.bf16.msra.mxu0 0
        %626 = vmatprep.subr.bf16.mxu0 0
        %627 = vmatpush1.bf16.msra.mxu0 0
        %628 = vmatprep.mubr.bf16.mxu0 0
        %629 = vmatmul.mubr.bf16.gmra.mrb[0].mxu0 %v581
        %v630 = vpop.f32.mrb[0].mxu0
        %v631 = vadd.f32 %v532, %v630
        %v632 = vpop.f32.mrb[0].mxu0
        %v633 = vpop.f32.mrb[0].mxu0
        %v634 = vadd.f32 %v532, %v633
        %v635 = vpop.f32.mrb[0].mxu0
        %v636 = vadd.f32 %v536, %v635
        %637 = vmatprep.mubr.bf16.mxu0 0
        %638 = vmatmul.mubr.bf16.gmra.mrb[0].mxu0 %v584
        %v639 = vpop.f32.mrb[0].mxu0
        %v640 = vadd.f32 %v532, %v639
        %v641 = vpop.f32.mrb[0].mxu0
        %v642 = vadd.f32 %v536, %v641
        %v643 = vpop.f32.mrb[0].mxu0
        %v644 = vadd.f32 %v532, %v643
        %v645 = vpop.f32.mrb[0].mxu0
        %v646 = vadd.f32 %v536, %v645
        %647 = vmatprep.mubr.bf16.mxu0 0
        %648 = vmatmul.mubr.bf16.gmra.mrb[0].mxu0 %v587
        %v649 = vpop.f32.mrb[0].mxu0
        %v650 = vadd.f32 %v532, %v649
        %v651 = vpop.f32.mrb[0].mxu0
        %v652 = vadd.f32 %v536, %v651
        %v653 = vpop.f32.mrb[0].mxu0
        %v654 = vadd.f32 %v532, %v653
        %v655 = vpop.f32.mrb[0].mxu0
        %656 = vdwg.mxu0
        %v657 = vpack.c.bf16 %v642, %v636
        %v658 = vpack.c.bf16 %v652, %v646
        %v659 = vmax.f32 %v631, 0.0
        %v660 = vmax.f32 %v634, 0.0
        %v661 = vmax.f32 %v640, 0.0
        %v662 = vmax.f32 %v644, 0.0
        %v663 = vmax.f32 %v650, 0.0
        %v664 = vmax.f32 %v654, 0.0
        %v665 = vpack.c.bf16 %v659, %v659
        %v666 = vpack.c.bf16 %v660, %v660
        %v667 = vpack.c.bf16 %v661, %v661
        %v668 = vpack.c.bf16 %v662, %v662
        %v669 = vpack.c.bf16 %v663, %v663
        %v670 = vpack.c.bf16 %v664, %v664
        %671 = vst [vmem:[#allocation2] sm:$0xf] 0
        %s672 = sadd.s32 %s271, 4294967295
        %p673 = scmp.ge.s32.totalorder %s672, 0
        %p674 = scmp.lt.s32.totalorder %s672, 8
        %p675 = pnand %p673, %p674
        %p676 = pneg %p675
        %s677 = scalar_select %p676, 1, 0
        %v678 = vstv %s677
        %vm679 = vcmp.eq.s32.totalorder %v678, 1
        %v680 = vsel %vm679, %v665, 0
        %v682 = vrot.slane %v680, 4
        %684 = vst [vmem:[#allocation2] sm:$0xf0] %v682
        %685 = vst [vmem:[#allocation2 + $0x8] sm:$0xff] 0
        %p686 = scmp.ge.s32.totalorder %s271, 0
        %p687 = scmp.lt.s32.totalorder %s271, 8
        %p688 = pnand %p686, %p687
        %p689 = pneg %p688
        %s690 = scalar_select %p689, 1, 0
        %v691 = vstv %s690
        %vm692 = vcmp.eq.s32.totalorder %v691, 1
        %v693 = vsel %vm692, %v666, 0
        %694 = vst [vmem:[#allocation2 + $0x10] sm:$0xf] %v693
        %695 = vst [vmem:[#allocation2 + $0x10] sm:$0xf0] 0
        %696 = vst [vmem:[#allocation2 + $0x18] sm:$0xf] 0
        %s697 = sadd.s32 %s271, 1
        %p698 = scmp.ge.s32.totalorder %s697, 0
        %p699 = scmp.lt.s32.totalorder %s697, 8
        %p700 = pnand %p698, %p699
        %p701 = pneg %p700
        %s702 = scalar_select %p701, 1, 0
        %v703 = vstv %s702
        %vm704 = vcmp.eq.s32.totalorder %v703, 1
        %v705 = vsel %vm704, %v667, 0
        %v707 = vrot.slane %v705, 4
        %709 = vst [vmem:[#allocation2 + $0x18] sm:$0xf0] %v707
        %710 = vst [vmem:[#allocation2 + $0x20] sm:$0xff] 0
        %s711 = sadd.s32 %s271, 2
        %p712 = scmp.ge.s32.totalorder %s711, 0
        %p713 = scmp.lt.s32.totalorder %s711, 8
        %p714 = pnand %p712, %p713
        %p715 = pneg %p714
        %s716 = scalar_select %p715, 1, 0
        %v717 = vstv %s716
        %vm718 = vcmp.eq.s32.totalorder %v717, 1
        %v719 = vsel %vm718, %v668, 0
        %720 = vst [vmem:[#allocation2 + $0x28] sm:$0xf] %v719
        %721 = vst [vmem:[#allocation2 + $0x28] sm:$0xf0] 0
        %722 = vst [vmem:[#allocation2 + $0x30] sm:$0xf] 0
        %s723 = sadd.s32 %s271, 3
        %p724 = scmp.ge.s32.totalorder %s723, 0
        %p725 = scmp.lt.s32.totalorder %s723, 8
        %p726 = pnand %p724, %p725
        %p727 = pneg %p726
        %s728 = scalar_select %p727, 1, 0
        %v729 = vstv %s728
        %vm730 = vcmp.eq.s32.totalorder %v729, 1
        %v731 = vsel %vm730, %v669, 0
        %v733 = vrot.slane %v731, 4
        %735 = vst [vmem:[#allocation2 + $0x30] sm:$0xf0] %v733
        %736 = vst [vmem:[#allocation2 + $0x38] sm:$0xff] 0
        %s737 = sadd.s32 %s271, 4
        %p738 = scmp.ge.s32.totalorder %s737, 0
        %p739 = scmp.lt.s32.totalorder %s737, 8
        %p740 = pnand %p738, %p739
        %p741 = pneg %p740
        %s742 = scalar_select %p741, 1, 0
        %v743 = vstv %s742
        %vm744 = vcmp.eq.s32.totalorder %v743, 1
        %v745 = vsel %vm744, %v670, 0
        %746 = vst [vmem:[#allocation2 + $0x40] sm:$0xf] %v745
        %747 = vst [vmem:[#allocation2 + $0x40] sm:$0xf0] 0
        %748 = vst [vmem:[#allocation2 + $0x48] sm:$0xf] 0
        %v749 = vld [vmem:[#allocation2] sm:$0xf8]
        %v750 = vld [vmem:[#allocation2 + $0x8] sm:$0xff]
        %v751 = vld [vmem:[#allocation2 + $0x10] sm:$0xff]
        %v752 = vld [vmem:[#allocation2 + $0x18] sm:$0xff]
        %v753 = vld [vmem:[#allocation2 + $0x20] sm:$0xff]
        %v754 = vld [vmem:[#allocation2 + $0x28] sm:$0xff]
        %v755 = vld [vmem:[#allocation2 + $0x30] sm:$0xf]
        %v756 = vld [vmem:[#allocation3] sm:$0xf]
        %v757 = vld [vmem:[#allocation3 + $0x4] sm:$0xf]
        %v758 = vld [vmem:[#allocation3 + $0x8] sm:$0xf]
        %v759 = vld [vmem:[#allocation3 + $0xc] sm:$0xf]
        %v760 = vld [vmem:[#allocation3 + $0x10] sm:$0xf]
        %v761 = vld [vmem:[#allocation3 + $0x14] sm:$0xf]
        %v762 = vld [vmem:[#allocation3 + $0x18] sm:$0xf]
        %v763 = vld [vmem:[#allocation3 + $0x1c] sm:$0xf]
        %v764 = vld [vmem:[#allocation3 + $0x20] sm:$0xf]
        %v765 = vld [vmem:[#allocation3 + $0x24] sm:$0xf]
        %v766 = vld [vmem:[#allocation3 + $0x28] sm:$0xf]
        %v767 = vld [vmem:[#allocation3 + $0x2c] sm:$0xf]
        %v768 = vld [vmem:[#allocation3 + $0x30] sm:$0xf]
        %v769 = vld [vmem:[#allocation3 + $0x34] sm:$0xf]
        %v770 = vld [vmem:[#allocation3 + $0x38] sm:$0xf]
        %v771 = vld [vmem:[#allocation3 + $0x3c] sm:$0xf]
        %v772 = vld [vmem:[#allocation2] sm:$0xf0]
        %s773 = scalar_lea.vmem [#allocation3], 64
        %v774 = vld [vmem:[%s773] sm:$0xf]
        %v775 = vld [vmem:[%s773 + $0x4] sm:$0xf]
        %v776 = vld [vmem:[%s773 + $0x8] sm:$0xf]
        %v777 = vld [vmem:[%s773 + $0xc] sm:$0xf]
        %v778 = vld [vmem:[%s773 + $0x10] sm:$0xf]
        %v779 = vld [vmem:[%s773 + $0x14] sm:$0xf]
        %v780 = vld [vmem:[%s773 + $0x18] sm:$0xf]
        %v781 = vld [vmem:[%s773 + $0x1c] sm:$0xf]
        %v782 = vld [vmem:[%s773 + $0x20] sm:$0xf]
        %v783 = vld [vmem:[%s773 + $0x24] sm:$0xf]
        %v784 = vld [vmem:[%s773 + $0x28] sm:$0xf]
        %v785 = vld [vmem:[%s773 + $0x2c] sm:$0xf]
        %v786 = vld [vmem:[%s773 + $0x30] sm:$0xf]
        %v787 = vld [vmem:[%s773 + $0x34] sm:$0xf]
        %v788 = vld [vmem:[%s773 + $0x38] sm:$0xf]
        %v789 = vld [vmem:[%s773 + $0x3c] sm:$0xf]
        %vm797 = vcmask 1043456
        %v798 = vrot.slane %v772, 4
        %v799 = vrot.slane %v750, 4
        %v800 = vsel %vm797, %v798, %v799
        %v801 = vrot.slane %v751, 4
        %v802 = vsel %vm797, %v799, %v801
        %v803 = vrot.slane %v752, 4
        %v804 = vsel %vm797, %v801, %v803
        %v805 = vrot.slane %v753, 4
        %v806 = vsel %vm797, %v803, %v805
        %v807 = vrot.slane %v754, 4
        %v808 = vsel %vm797, %v805, %v807
        %v809 = vrot.slane %v755, 4
        %v810 = vsel %vm797, %v807, %v809
        %v833 = vunpack.c.l.b16 %v774
        %v834 = vunpack.c.l.b16 %v775
        %v835 = vunpack.c.l.b16 %v776
        %v836 = vunpack.c.l.b16 %v777
        %v837 = vunpack.c.l.b16 %v778
        %v838 = vunpack.c.l.b16 %v779
        %v839 = vunpack.c.l.b16 %v780
        %v840 = vunpack.c.l.b16 %v781
        %v841 = vunpack.c.l.b16 %v782
        %v842 = vunpack.c.l.b16 %v783
        %v843 = vunpack.c.l.b16 %v784
        %v844 = vunpack.c.l.b16 %v785
        %v845 = vunpack.c.l.b16 %v786
        %v846 = vunpack.c.l.b16 %v787
        %v847 = vunpack.c.l.b16 %v788
        %v848 = vunpack.c.l.b16 %v789
        %v849 = vpack.c.b16 %v834, %v833
        %v850 = vpack.c.b16 %v836, %v835
        %v851 = vpack.c.b16 %v838, %v837
        %v852 = vpack.c.b16 %v840, %v839
        %v853 = vpack.c.b16 %v842, %v841
        %v854 = vpack.c.b16 %v844, %v843
        %v855 = vpack.c.b16 %v846, %v845
        %v856 = vpack.c.b16 %v848, %v847
        %865 = vmatprep.subr.bf16.mxu0 0
        %866 = vmatpush1.bf16.msra.mxu0 %v849
        %867 = vmatprep.subr.bf16.mxu0 0
        %868 = vmatpush1.bf16.msra.mxu0 %v850
        %869 = vmatprep.subr.bf16.mxu0 0
        %870 = vmatpush1.bf16.msra.mxu0 %v851
        %871 = vmatprep.subr.bf16.mxu0 0
        %872 = vmatpush1.bf16.msra.mxu0 %v852
        %873 = vmatprep.subr.bf16.mxu0 0
        %874 = vmatpush1.bf16.msra.mxu0 %v853
        %875 = vmatprep.subr.bf16.mxu0 0
        %876 = vmatpush1.bf16.msra.mxu0 %v854
        %877 = vmatprep.subr.bf16.mxu0 0
        %878 = vmatpush1.bf16.msra.mxu0 %v855
        %879 = vmatprep.subr.bf16.mxu0 0
        %880 = vmatpush1.bf16.msra.mxu0 %v856
        %881 = vmatprep.subr.bf16.mxu0 0
        %882 = vmatpush1.bf16.msra.mxu0 0
        %883 = vmatprep.subr.bf16.mxu0 0
        %884 = vmatpush1.bf16.msra.mxu0 0
        %885 = vmatprep.subr.bf16.mxu0 0
        %886 = vmatpush1.bf16.msra.mxu0 0
        %887 = vmatprep.subr.bf16.mxu0 0
        %888 = vmatpush1.bf16.msra.mxu0 0
        %889 = vmatprep.subr.bf16.mxu0 0
        %890 = vmatpush1.bf16.msra.mxu0 0
        %891 = vmatprep.subr.bf16.mxu0 0
        %892 = vmatpush1.bf16.msra.mxu0 0
        %893 = vmatprep.subr.bf16.mxu0 0
        %894 = vmatpush1.bf16.msra.mxu0 0
        %895 = vmatprep.subr.bf16.mxu0 0
        %896 = vmatpush1.bf16.msra.mxu0 0
        %897 = vmatprep.mubr.bf16.mxu0 0
        %898 = vmatmul.mubr.bf16.gmra.mrb[0].mxu0 %v800
        %v899 = vpop.f32.mrb[0].mxu0
        %v900 = vadd.f32 0.0, %v899
        %v901 = vpop.f32.mrb[0].mxu0
        %v902 = vpop.f32.mrb[0].mxu0
        %v903 = vpop.f32.mrb[0].mxu0
        %904 = vmatprep.mubr.bf16.mxu0 0
        %905 = vmatmul.mubr.bf16.gmra.mrb[0].mxu0 %v802
        %v906 = vpop.f32.mrb[0].mxu0
        %v907 = vpop.f32.mrb[0].mxu0
        %v908 = vpop.f32.mrb[0].mxu0
        %v909 = vadd.f32 0.0, %v908
        %v910 = vpop.f32.mrb[0].mxu0
        %911 = vmatprep.mubr.bf16.mxu0 0
        %912 = vmatmul.mubr.bf16.gmra.mrb[0].mxu0 %v804
        %v913 = vpop.f32.mrb[0].mxu0
        %v914 = vpop.f32.mrb[0].mxu0
        %v915 = vpop.f32.mrb[0].mxu0
        %v916 = vpop.f32.mrb[0].mxu0
        %917 = vmatprep.mubr.bf16.mxu0 0
        %918 = vmatmul.mubr.bf16.gmra.mrb[0].mxu0 %v806
        %v919 = vpop.f32.mrb[0].mxu0
        %v920 = vadd.f32 0.0, %v919
        %v921 = vpop.f32.mrb[0].mxu0
        %v922 = vpop.f32.mrb[0].mxu0
        %v923 = vpop.f32.mrb[0].mxu0
        %924 = vmatprep.mubr.bf16.mxu0 0
        %925 = vmatmul.mubr.bf16.gmra.mrb[0].mxu0 %v808
        %v926 = vpop.f32.mrb[0].mxu0
        %v927 = vpop.f32.mrb[0].mxu0
        %v928 = vpop.f32.mrb[0].mxu0
        %v929 = vadd.f32 0.0, %v928
        %v930 = vpop.f32.mrb[0].mxu0
        %931 = vmatprep.mubr.bf16.mxu0 0
        %932 = vmatmul.mubr.bf16.gmra.mrb[0].mxu0 %v810
        %v933 = vpop.f32.mrb[0].mxu0
        %v934 = vpop.f32.mrb[0].mxu0
        %v935 = vpop.f32.mrb[0].mxu0
        %v936 = vpop.f32.mrb[0].mxu0
        %937 = vdwg.mxu0
        %vm938 = vsmask.f32 4352
        %v940 = vshrl.u32 %v749, 16
        %v942 = vrot.slane %v940, 3
        %v943 = vshll.u32 %v749, 16
        %v945 = vrot.slane %v943, 4
        %v946 = vor.u32 %v942, %v945
        %v948 = vshrl.u32 %v750, 16
        %v950 = vrot.slane %v948, 3
        %v951 = vshll.u32 %v750, 16
        %v953 = vrot.slane %v951, 4
        %v954 = vor.u32 %v950, %v953
        %v955 = vsel %vm938, %v946, %v954
        %v957 = vshrl.u32 %v751, 16
        %v959 = vrot.slane %v957, 3
        %v960 = vshll.u32 %v751, 16
        %v962 = vrot.slane %v960, 4
        %v963 = vor.u32 %v959, %v962
        %v964 = vsel %vm938, %v954, %v963
        %v966 = vshrl.u32 %v752, 16
        %v968 = vrot.slane %v966, 3
        %v969 = vshll.u32 %v752, 16
        %v971 = vrot.slane %v969, 4
        %v972 = vor.u32 %v968, %v971
        %v973 = vsel %vm938, %v963, %v972
        %v975 = vshrl.u32 %v753, 16
        %v977 = vrot.slane %v975, 3
        %v978 = vshll.u32 %v753, 16
        %v980 = vrot.slane %v978, 4
        %v981 = vor.u32 %v977, %v980
        %v982 = vsel %vm938, %v972, %v981
        %v984 = vshrl.u32 %v754, 16
        %v986 = vrot.slane %v984, 3
        %v987 = vshll.u32 %v754, 16
        %v989 = vrot.slane %v987, 4
        %v990 = vor.u32 %v986, %v989
        %v991 = vsel %vm938, %v981, %v990
        %v993 = vshrl.u32 %v755, 16
        %v995 = vrot.slane %v993, 3
        %v996 = vshll.u32 %v755, 16
        %v998 = vrot.slane %v996, 4
        %v999 = vor.u32 %v995, %v998
        %v1000 = vsel %vm938, %v990, %v999
        %v1023 = vunpack.c.l.b16 %v756
        %v1024 = vunpack.c.l.b16 %v757
        %v1025 = vunpack.c.l.b16 %v758
        %v1026 = vunpack.c.l.b16 %v759
        %v1027 = vunpack.c.l.b16 %v760
        %v1028 = vunpack.c.l.b16 %v761
        %v1029 = vunpack.c.l.b16 %v762
        %v1030 = vunpack.c.l.b16 %v763
        %v1031 = vunpack.c.l.b16 %v764
        %v1032 = vunpack.c.l.b16 %v765
        %v1033 = vunpack.c.l.b16 %v766
        %v1034 = vunpack.c.l.b16 %v767
        %v1035 = vunpack.c.l.b16 %v768
        %v1036 = vunpack.c.l.b16 %v769
        %v1037 = vunpack.c.l.b16 %v770
        %v1038 = vunpack.c.l.b16 %v771
        %v1039 = vpack.c.b16 %v1024, %v1023
        %v1040 = vpack.c.b16 %v1026, %v1025
        %v1041 = vpack.c.b16 %v1028, %v1027
        %v1042 = vpack.c.b16 %v1030, %v1029
        %v1043 = vpack.c.b16 %v1032, %v1031
        %v1044 = vpack.c.b16 %v1034, %v1033
        %v1045 = vpack.c.b16 %v1036, %v1035
        %v1046 = vpack.c.b16 %v1038, %v1037
        %1055 = vmatprep.subr.bf16.mxu0 0
        %1056 = vmatpush1.bf16.msra.mxu0 %v1039
        %1057 = vmatprep.subr.bf16.mxu0 0
        %1058 = vmatpush1.bf16.msra.mxu0 %v1040
        %1059 = vmatprep.subr.bf16.mxu0 0
        %1060 = vmatpush1.bf16.msra.mxu0 %v1041
        %1061 = vmatprep.subr.bf16.mxu0 0
        %1062 = vmatpush1.bf16.msra.mxu0 %v1042
        %1063 = vmatprep.subr.bf16.mxu0 0
        %1064 = vmatpush1.bf16.msra.mxu0 %v1043
        %1065 = vmatprep.subr.bf16.mxu0 0
        %1066 = vmatpush1.bf16.msra.mxu0 %v1044
        %1067 = vmatprep.subr.bf16.mxu0 0
        %1068 = vmatpush1.bf16.msra.mxu0 %v1045
        %1069 = vmatprep.subr.bf16.mxu0 0
        %1070 = vmatpush1.bf16.msra.mxu0 %v1046
        %1071 = vmatprep.subr.bf16.mxu0 0
        %1072 = vmatpush1.bf16.msra.mxu0 0
        %1073 = vmatprep.subr.bf16.mxu0 0
        %1074 = vmatpush1.bf16.msra.mxu0 0
        %1075 = vmatprep.subr.bf16.mxu0 0
        %1076 = vmatpush1.bf16.msra.mxu0 0
        %1077 = vmatprep.subr.bf16.mxu0 0
        %1078 = vmatpush1.bf16.msra.mxu0 0
        %1079 = vmatprep.subr.bf16.mxu0 0
        %1080 = vmatpush1.bf16.msra.mxu0 0
        %1081 = vmatprep.subr.bf16.mxu0 0
        %1082 = vmatpush1.bf16.msra.mxu0 0
        %1083 = vmatprep.subr.bf16.mxu0 0
        %1084 = vmatpush1.bf16.msra.mxu0 0
        %1085 = vmatprep.subr.bf16.mxu0 0
        %1086 = vmatpush1.bf16.msra.mxu0 0
        %1087 = vmatprep.mubr.bf16.mxu0 0
        %1088 = vmatmul.mubr.bf16.gmra.mrb[0].mxu0 %v955
        %v1089 = vpop.f32.mrb[0].mxu0
        %v1090 = vadd.f32 %v900, %v1089
        %v1091 = vpop.f32.mrb[0].mxu0
        %v1092 = vpop.f32.mrb[0].mxu0
        %v1093 = vpop.f32.mrb[0].mxu0
        %1094 = vmatprep.mubr.bf16.mxu0 0
        %1095 = vmatmul.mubr.bf16.gmra.mrb[0].mxu0 %v964
        %v1096 = vpop.f32.mrb[0].mxu0
        %v1097 = vpop.f32.mrb[0].mxu0
        %v1098 = vpop.f32.mrb[0].mxu0
        %v1099 = vadd.f32 %v909, %v1098
        %v1100 = vpop.f32.mrb[0].mxu0
        %1101 = vmatprep.mubr.bf16.mxu0 0
        %1102 = vmatmul.mubr.bf16.gmra.mrb[0].mxu0 %v973
        %v1103 = vpop.f32.mrb[0].mxu0
        %v1104 = vpop.f32.mrb[0].mxu0
        %v1105 = vpop.f32.mrb[0].mxu0
        %v1106 = vpop.f32.mrb[0].mxu0
        %1107 = vmatprep.mubr.bf16.mxu0 0
        %1108 = vmatmul.mubr.bf16.gmra.mrb[0].mxu0 %v982
        %v1109 = vpop.f32.mrb[0].mxu0
        %v1110 = vadd.f32 %v920, %v1109
        %v1111 = vpop.f32.mrb[0].mxu0
        %v1112 = vpop.f32.mrb[0].mxu0
        %v1113 = vpop.f32.mrb[0].mxu0
        %1114 = vmatprep.mubr.bf16.mxu0 0
        %1115 = vmatmul.mubr.bf16.gmra.mrb[0].mxu0 %v991
        %v1116 = vpop.f32.mrb[0].mxu0
        %v1117 = vpop.f32.mrb[0].mxu0
        %v1118 = vpop.f32.mrb[0].mxu0
        %v1119 = vadd.f32 %v929, %v1118
        %v1120 = vpop.f32.mrb[0].mxu0
        %1121 = vmatprep.mubr.bf16.mxu0 0
        %1122 = vmatmul.mubr.bf16.gmra.mrb[0].mxu0 %v1000
        %v1123 = vpop.f32.mrb[0].mxu0
        %v1124 = vpop.f32.mrb[0].mxu0
        %v1125 = vpop.f32.mrb[0].mxu0
        %v1126 = vpop.f32.mrb[0].mxu0
        %1127 = vdwg.mxu0
        %v1128 = vld [vmem:[#allocation2 + $0x30] sm:$0x1f]
        %s1129 = scalar_lea.vmem [#allocation3], 128
        %v1130 = vld [vmem:[%s1129] sm:$0xf]
        %v1131 = vld [vmem:[%s1129 + $0x4] sm:$0xf]
        %v1132 = vld [vmem:[%s1129 + $0x8] sm:$0xf]
        %v1133 = vld [vmem:[%s1129 + $0xc] sm:$0xf]
        %v1134 = vld [vmem:[%s1129 + $0x10] sm:$0xf]
        %v1135 = vld [vmem:[%s1129 + $0x14] sm:$0xf]
        %v1136 = vld [vmem:[%s1129 + $0x18] sm:$0xf]
        %v1137 = vld [vmem:[%s1129 + $0x1c] sm:$0xf]
        %v1138 = vld [vmem:[%s1129 + $0x20] sm:$0xf]
        %v1139 = vld [vmem:[%s1129 + $0x24] sm:$0xf]
        %v1140 = vld [vmem:[%s1129 + $0x28] sm:$0xf]
        %v1141 = vld [vmem:[%s1129 + $0x2c] sm:$0xf]
        %v1142 = vld [vmem:[%s1129 + $0x30] sm:$0xf]
        %v1143 = vld [vmem:[%s1129 + $0x34] sm:$0xf]
        %v1144 = vld [vmem:[%s1129 + $0x38] sm:$0xf]
        %v1145 = vld [vmem:[%s1129 + $0x3c] sm:$0xf]
        %vm1146 = vsmask.f32 3328
        %v1148 = vshrl.u32 %v772, 16
        %v1150 = vrot.slane %v1148, 4
        %v1151 = vshll.u32 %v772, 16
        %v1153 = vrot.slane %v1151, 5
        %v1154 = vor.u32 %v1150, %v1153
        %v1155 = vrot.slane %v948, 4
        %v1156 = vrot.slane %v951, 5
        %v1157 = vor.u32 %v1155, %v1156
        %v1158 = vsel %vm1146, %v1154, %v1157
        %v1159 = vrot.slane %v957, 4
        %v1160 = vrot.slane %v960, 5
        %v1161 = vor.u32 %v1159, %v1160
        %v1162 = vsel %vm1146, %v1157, %v1161
        %v1163 = vrot.slane %v966, 4
        %v1164 = vrot.slane %v969, 5
        %v1165 = vor.u32 %v1163, %v1164
        %v1166 = vsel %vm1146, %v1161, %v1165
        %v1167 = vrot.slane %v975, 4
        %v1168 = vrot.slane %v978, 5
        %v1169 = vor.u32 %v1167, %v1168
        %v1170 = vsel %vm1146, %v1165, %v1169
        %v1171 = vrot.slane %v984, 4
        %v1172 = vrot.slane %v987, 5
        %v1173 = vor.u32 %v1171, %v1172
        %v1174 = vsel %vm1146, %v1169, %v1173
        %v1176 = vshrl.u32 %v1128, 16
        %v1178 = vrot.slane %v1176, 4
        %v1179 = vshll.u32 %v1128, 16
        %v1181 = vrot.slane %v1179, 5
        %v1182 = vor.u32 %v1178, %v1181
        %v1183 = vsel %vm1146, %v1173, %v1182
        %v1206 = vunpack.c.l.b16 %v1130
        %v1207 = vunpack.c.l.b16 %v1131
        %v1208 = vunpack.c.l.b16 %v1132
        %v1209 = vunpack.c.l.b16 %v1133
        %v1210 = vunpack.c.l.b16 %v1134
        %v1211 = vunpack.c.l.b16 %v1135
        %v1212 = vunpack.c.l.b16 %v1136
        %v1213 = vunpack.c.l.b16 %v1137
        %v1214 = vunpack.c.l.b16 %v1138
        %v1215 = vunpack.c.l.b16 %v1139
        %v1216 = vunpack.c.l.b16 %v1140
        %v1217 = vunpack.c.l.b16 %v1141
        %v1218 = vunpack.c.l.b16 %v1142
        %v1219 = vunpack.c.l.b16 %v1143
        %v1220 = vunpack.c.l.b16 %v1144
        %v1221 = vunpack.c.l.b16 %v1145
        %v1222 = vpack.c.b16 %v1207, %v1206
        %v1223 = vpack.c.b16 %v1209, %v1208
        %v1224 = vpack.c.b16 %v1211, %v1210
        %v1225 = vpack.c.b16 %v1213, %v1212
        %v1226 = vpack.c.b16 %v1215, %v1214
        %v1227 = vpack.c.b16 %v1217, %v1216
        %v1228 = vpack.c.b16 %v1219, %v1218
        %v1229 = vpack.c.b16 %v1221, %v1220
        %1238 = vmatprep.subr.bf16.mxu0 0
        %1239 = vmatpush1.bf16.msra.mxu0 %v1222
        %1240 = vmatprep.subr.bf16.mxu0 0
        %1241 = vmatpush1.bf16.msra.mxu0 %v1223
        %1242 = vmatprep.subr.bf16.mxu0 0
        %1243 = vmatpush1.bf16.msra.mxu0 %v1224
        %1244 = vmatprep.subr.bf16.mxu0 0
        %1245 = vmatpush1.bf16.msra.mxu0 %v1225
        %1246 = vmatprep.subr.bf16.mxu0 0
        %1247 = vmatpush1.bf16.msra.mxu0 %v1226
        %1248 = vmatprep.subr.bf16.mxu0 0
        %1249 = vmatpush1.bf16.msra.mxu0 %v1227
        %1250 = vmatprep.subr.bf16.mxu0 0
        %1251 = vmatpush1.bf16.msra.mxu0 %v1228
        %1252 = vmatprep.subr.bf16.mxu0 0
        %1253 = vmatpush1.bf16.msra.mxu0 %v1229
        %1254 = vmatprep.subr.bf16.mxu0 0
        %1255 = vmatpush1.bf16.msra.mxu0 0
        %1256 = vmatprep.subr.bf16.mxu0 0
        %1257 = vmatpush1.bf16.msra.mxu0 0
        %1258 = vmatprep.subr.bf16.mxu0 0
        %1259 = vmatpush1.bf16.msra.mxu0 0
        %1260 = vmatprep.subr.bf16.mxu0 0
        %1261 = vmatpush1.bf16.msra.mxu0 0
        %1262 = vmatprep.subr.bf16.mxu0 0
        %1263 = vmatpush1.bf16.msra.mxu0 0
        %1264 = vmatprep.subr.bf16.mxu0 0
        %1265 = vmatpush1.bf16.msra.mxu0 0
        %1266 = vmatprep.subr.bf16.mxu0 0
        %1267 = vmatpush1.bf16.msra.mxu0 0
        %1268 = vmatprep.subr.bf16.mxu0 0
        %1269 = vmatpush1.bf16.msra.mxu0 0
        %1270 = vmatprep.mubr.bf16.mxu0 0
        %1271 = vmatmul.mubr.bf16.gmra.mrb[0].mxu0 %v1158
        %v1272 = vpop.f32.mrb[0].mxu0
        %v1273 = vadd.f32 0.0, %v1272
        %v1274 = vpop.f32.mrb[0].mxu0
        %v1275 = vpop.f32.mrb[0].mxu0
        %v1276 = vpop.f32.mrb[0].mxu0
        %1277 = vmatprep.mubr.bf16.mxu0 0
        %1278 = vmatmul.mubr.bf16.gmra.mrb[0].mxu0 %v1162
        %v1279 = vpop.f32.mrb[0].mxu0
        %v1280 = vpop.f32.mrb[0].mxu0
        %v1281 = vpop.f32.mrb[0].mxu0
        %v1282 = vadd.f32 0.0, %v1281
        %v1283 = vpop.f32.mrb[0].mxu0
        %1284 = vmatprep.mubr.bf16.mxu0 0
        %1285 = vmatmul.mubr.bf16.gmra.mrb[0].mxu0 %v1166
        %v1286 = vpop.f32.mrb[0].mxu0
        %v1287 = vpop.f32.mrb[0].mxu0
        %v1288 = vpop.f32.mrb[0].mxu0
        %v1289 = vpop.f32.mrb[0].mxu0
        %1290 = vmatprep.mubr.bf16.mxu0 0
        %1291 = vmatmul.mubr.bf16.gmra.mrb[0].mxu0 %v1170
        %v1292 = vpop.f32.mrb[0].mxu0
        %v1293 = vadd.f32 0.0, %v1292
        %v1294 = vpop.f32.mrb[0].mxu0
        %v1295 = vpop.f32.mrb[0].mxu0
        %v1296 = vpop.f32.mrb[0].mxu0
        %1297 = vmatprep.mubr.bf16.mxu0 0
        %1298 = vmatmul.mubr.bf16.gmra.mrb[0].mxu0 %v1174
        %v1299 = vpop.f32.mrb[0].mxu0
        %v1300 = vpop.f32.mrb[0].mxu0
        %v1301 = vpop.f32.mrb[0].mxu0
        %v1302 = vadd.f32 0.0, %v1301
        %v1303 = vpop.f32.mrb[0].mxu0
        %1304 = vmatprep.mubr.bf16.mxu0 0
        %1305 = vmatmul.mubr.bf16.gmra.mrb[0].mxu0 %v1183
        %v1306 = vpop.f32.mrb[0].mxu0
        %v1307 = vpop.f32.mrb[0].mxu0
        %v1308 = vpop.f32.mrb[0].mxu0
        %v1309 = vpop.f32.mrb[0].mxu0
        %1310 = vdwg.mxu0
        %v1311 = vadd.f32 %v1090, %v1273
        %v1312 = vadd.f32 %v1099, %v1282
        %v1313 = vadd.f32 %v1110, %v1293
        %v1314 = vadd.f32 %v1119, %v1302
        %v1315 = vld [vmem:[#allocation2 + $0x8] sm:$0x80]
        %v1316 = vld [vmem:[#allocation2 + $0x10] sm:$0xff]
        %v1317 = vld [vmem:[#allocation2 + $0x18] sm:$0xff]
        %v1318 = vld [vmem:[#allocation2 + $0x20] sm:$0xff]
        %v1319 = vld [vmem:[#allocation2 + $0x28] sm:$0xff]
        %v1320 = vld [vmem:[#allocation2 + $0x30] sm:$0xff]
        %v1321 = vld [vmem:[#allocation2 + $0x38] sm:$0xff]
        %s1322 = scalar_lea.vmem [#allocation3], 192
        %v1323 = vld [vmem:[%s1322] sm:$0xf]
        %v1324 = vld [vmem:[%s1322 + $0x4] sm:$0xf]
        %v1325 = vld [vmem:[%s1322 + $0x8] sm:$0xf]
        %v1326 = vld [vmem:[%s1322 + $0xc] sm:$0xf]
        %v1327 = vld [vmem:[%s1322 + $0x10] sm:$0xf]
        %v1328 = vld [vmem:[%s1322 + $0x14] sm:$0xf]
        %v1329 = vld [vmem:[%s1322 + $0x18] sm:$0xf]
        %v1330 = vld [vmem:[%s1322 + $0x1c] sm:$0xf]
        %v1331 = vld [vmem:[%s1322 + $0x20] sm:$0xf]
        %v1332 = vld [vmem:[%s1322 + $0x24] sm:$0xf]
        %v1333 = vld [vmem:[%s1322 + $0x28] sm:$0xf]
        %v1334 = vld [vmem:[%s1322 + $0x2c] sm:$0xf]
        %v1335 = vld [vmem:[%s1322 + $0x30] sm:$0xf]
        %v1336 = vld [vmem:[%s1322 + $0x34] sm:$0xf]
        %v1337 = vld [vmem:[%s1322 + $0x38] sm:$0xf]
        %v1338 = vld [vmem:[%s1322 + $0x3c] sm:$0xf]
        %vm1339 = vsmask.f32 256
        %v1341 = vshrl.u32 %v1315, 16
        %v1343 = vrot.slane %v1341, 7
        %v1345 = vshrl.u32 %v1316, 16
        %v1347 = vrot.slane %v1345, 7
        %v1348 = vshll.u32 %v1316, 16
        %v1350 = vor.u32 %v1347, %v1348
        %v1351 = vsel %vm1339, %v1343, %v1350
        %v1353 = vshrl.u32 %v1317, 16
        %v1355 = vrot.slane %v1353, 7
        %v1356 = vshll.u32 %v1317, 16
        %v1358 = vor.u32 %v1355, %v1356
        %v1359 = vsel %vm1339, %v1347, %v1358
        %v1361 = vshrl.u32 %v1318, 16
        %v1363 = vrot.slane %v1361, 7
        %v1364 = vshll.u32 %v1318, 16
        %v1366 = vor.u32 %v1363, %v1364
        %v1367 = vsel %vm1339, %v1355, %v1366
        %v1369 = vshrl.u32 %v1319, 16
        %v1371 = vrot.slane %v1369, 7
        %v1372 = vshll.u32 %v1319, 16
        %v1374 = vor.u32 %v1371, %v1372
        %v1375 = vsel %vm1339, %v1363, %v1374
        %v1377 = vshrl.u32 %v1320, 16
        %v1379 = vrot.slane %v1377, 7
        %v1380 = vshll.u32 %v1320, 16
        %v1382 = vor.u32 %v1379, %v1380
        %v1383 = vsel %vm1339, %v1371, %v1382
        %v1385 = vshrl.u32 %v1321, 16
        %v1387 = vrot.slane %v1385, 7
        %v1388 = vshll.u32 %v1321, 16
        %v1390 = vor.u32 %v1387, %v1388
        %v1391 = vsel %vm1339, %v1379, %v1390
        %v1414 = vunpack.c.l.b16 %v1323
        %v1415 = vunpack.c.l.b16 %v1324
        %v1416 = vunpack.c.l.b16 %v1325
        %v1417 = vunpack.c.l.b16 %v1326
        %v1418 = vunpack.c.l.b16 %v1327
        %v1419 = vunpack.c.l.b16 %v1328
        %v1420 = vunpack.c.l.b16 %v1329
        %v1421 = vunpack.c.l.b16 %v1330
        %v1422 = vunpack.c.l.b16 %v1331
        %v1423 = vunpack.c.l.b16 %v1332
        %v1424 = vunpack.c.l.b16 %v1333
        %v1425 = vunpack.c.l.b16 %v1334
        %v1426 = vunpack.c.l.b16 %v1335
        %v1427 = vunpack.c.l.b16 %v1336
        %v1428 = vunpack.c.l.b16 %v1337
        %v1429 = vunpack.c.l.b16 %v1338
        %v1430 = vpack.c.b16 %v1415, %v1414
        %v1431 = vpack.c.b16 %v1417, %v1416
        %v1432 = vpack.c.b16 %v1419, %v1418
        %v1433 = vpack.c.b16 %v1421, %v1420
        %v1434 = vpack.c.b16 %v1423, %v1422
        %v1435 = vpack.c.b16 %v1425, %v1424
        %v1436 = vpack.c.b16 %v1427, %v1426
        %v1437 = vpack.c.b16 %v1429, %v1428
        %1446 = vmatprep.subr.bf16.mxu0 0
        %1447 = vmatpush1.bf16.msra.mxu0 %v1430
        %1448 = vmatprep.subr.bf16.mxu0 0
        %1449 = vmatpush1.bf16.msra.mxu0 %v1431
        %1450 = vmatprep.subr.bf16.mxu0 0
        %1451 = vmatpush1.bf16.msra.mxu0 %v1432
        %1452 = vmatprep.subr.bf16.mxu0 0
        %1453 = vmatpush1.bf16.msra.mxu0 %v1433
        %1454 = vmatprep.subr.bf16.mxu0 0
        %1455 = vmatpush1.bf16.msra.mxu0 %v1434
        %1456 = vmatprep.subr.bf16.mxu0 0
        %1457 = vmatpush1.bf16.msra.mxu0 %v1435
        %1458 = vmatprep.subr.bf16.mxu0 0
        %1459 = vmatpush1.bf16.msra.mxu0 %v1436
        %1460 = vmatprep.subr.bf16.mxu0 0
        %1461 = vmatpush1.bf16.msra.mxu0 %v1437
        %1462 = vmatprep.subr.bf16.mxu0 0
        %1463 = vmatpush1.bf16.msra.mxu0 0
        %1464 = vmatprep.subr.bf16.mxu0 0
        %1465 = vmatpush1.bf16.msra.mxu0 0
        %1466 = vmatprep.subr.bf16.mxu0 0
        %1467 = vmatpush1.bf16.msra.mxu0 0
        %1468 = vmatprep.subr.bf16.mxu0 0
        %1469 = vmatpush1.bf16.msra.mxu0 0
        %1470 = vmatprep.subr.bf16.mxu0 0
        %1471 = vmatpush1.bf16.msra.mxu0 0
        %1472 = vmatprep.subr.bf16.mxu0 0
        %1473 = vmatpush1.bf16.msra.mxu0 0
        %1474 = vmatprep.subr.bf16.mxu0 0
        %1475 = vmatpush1.bf16.msra.mxu0 0
        %1476 = vmatprep.subr.bf16.mxu0 0
        %1477 = vmatpush1.bf16.msra.mxu0 0
        %1478 = vmatprep.mubr.bf16.mxu0 0
        %1479 = vmatmul.mubr.bf16.gmra.mrb[0].mxu0 %v1351
        %v1480 = vpop.f32.mrb[0].mxu0
        %v1481 = vadd.f32 0.0, %v1480
        %v1482 = vpop.f32.mrb[0].mxu0
        %v1483 = vpop.f32.mrb[0].mxu0
        %v1484 = vpop.f32.mrb[0].mxu0
        %1485 = vmatprep.mubr.bf16.mxu0 0
        %1486 = vmatmul.mubr.bf16.gmra.mrb[0].mxu0 %v1359
        %v1487 = vpop.f32.mrb[0].mxu0
        %v1488 = vpop.f32.mrb[0].mxu0
        %v1489 = vpop.f32.mrb[0].mxu0
        %v1490 = vadd.f32 0.0, %v1489
        %v1491 = vpop.f32.mrb[0].mxu0
        %1492 = vmatprep.mubr.bf16.mxu0 0
        %1493 = vmatmul.mubr.bf16.gmra.mrb[0].mxu0 %v1367
        %v1494 = vpop.f32.mrb[0].mxu0
        %v1495 = vpop.f32.mrb[0].mxu0
        %v1496 = vpop.f32.mrb[0].mxu0
        %v1497 = vpop.f32.mrb[0].mxu0
        %1498 = vmatprep.mubr.bf16.mxu0 0
        %1499 = vmatmul.mubr.bf16.gmra.mrb[0].mxu0 %v1375
        %v1500 = vpop.f32.mrb[0].mxu0
        %v1501 = vadd.f32 0.0, %v1500
        %v1502 = vpop.f32.mrb[0].mxu0
        %v1503 = vpop.f32.mrb[0].mxu0
        %v1504 = vpop.f32.mrb[0].mxu0
        %1505 = vmatprep.mubr.bf16.mxu0 0
        %1506 = vmatmul.mubr.bf16.gmra.mrb[0].mxu0 %v1383
        %v1507 = vpop.f32.mrb[0].mxu0
        %v1508 = vpop.f32.mrb[0].mxu0
        %v1509 = vpop.f32.mrb[0].mxu0
        %v1510 = vadd.f32 0.0, %v1509
        %v1511 = vpop.f32.mrb[0].mxu0
        %1512 = vmatprep.mubr.bf16.mxu0 0
        %1513 = vmatmul.mubr.bf16.gmra.mrb[0].mxu0 %v1391
        %v1514 = vpop.f32.mrb[0].mxu0
        %v1515 = vpop.f32.mrb[0].mxu0
        %v1516 = vpop.f32.mrb[0].mxu0
        %v1517 = vpop.f32.mrb[0].mxu0
        %1518 = vdwg.mxu0
        %v1519 = vadd.f32 %v1311, %v1481
        %v1520 = vadd.f32 %v1312, %v1490
        %v1521 = vadd.f32 %v1313, %v1501
        %v1522 = vadd.f32 %v1314, %v1510
        %s1523 = scalar_lea.vmem [#allocation3], 256
        %v1524 = vld [vmem:[%s1523] sm:$0xf]
        %v1525 = vld [vmem:[%s1523 + $0x4] sm:$0xf]
        %v1526 = vld [vmem:[%s1523 + $0x8] sm:$0xf]
        %v1527 = vld [vmem:[%s1523 + $0xc] sm:$0xf]
        %v1528 = vld [vmem:[%s1523 + $0x10] sm:$0xf]
        %v1529 = vld [vmem:[%s1523 + $0x14] sm:$0xf]
        %v1530 = vld [vmem:[%s1523 + $0x18] sm:$0xf]
        %v1531 = vld [vmem:[%s1523 + $0x1c] sm:$0xf]
        %v1532 = vld [vmem:[%s1523 + $0x20] sm:$0xf]
        %v1533 = vld [vmem:[%s1523 + $0x24] sm:$0xf]
        %v1534 = vld [vmem:[%s1523 + $0x28] sm:$0xf]
        %v1535 = vld [vmem:[%s1523 + $0x2c] sm:$0xf]
        %v1536 = vld [vmem:[%s1523 + $0x30] sm:$0xf]
        %v1537 = vld [vmem:[%s1523 + $0x34] sm:$0xf]
        %v1538 = vld [vmem:[%s1523 + $0x38] sm:$0xf]
        %v1539 = vld [vmem:[%s1523 + $0x3c] sm:$0xf]
        %v1556 = vunpack.c.l.b16 %v1524
        %v1557 = vunpack.c.l.b16 %v1525
        %v1558 = vunpack.c.l.b16 %v1526
        %v1559 = vunpack.c.l.b16 %v1527
        %v1560 = vunpack.c.l.b16 %v1528
        %v1561 = vunpack.c.l.b16 %v1529
        %v1562 = vunpack.c.l.b16 %v1530
        %v1563 = vunpack.c.l.b16 %v1531
        %v1564 = vunpack.c.l.b16 %v1532
        %v1565 = vunpack.c.l.b16 %v1533
        %v1566 = vunpack.c.l.b16 %v1534
        %v1567 = vunpack.c.l.b16 %v1535
        %v1568 = vunpack.c.l.b16 %v1536
        %v1569 = vunpack.c.l.b16 %v1537
        %v1570 = vunpack.c.l.b16 %v1538
        %v1571 = vunpack.c.l.b16 %v1539
        %v1572 = vpack.c.b16 %v1557, %v1556
        %v1573 = vpack.c.b16 %v1559, %v1558
        %v1574 = vpack.c.b16 %v1561, %v1560
        %v1575 = vpack.c.b16 %v1563, %v1562
        %v1576 = vpack.c.b16 %v1565, %v1564
        %v1577 = vpack.c.b16 %v1567, %v1566
        %v1578 = vpack.c.b16 %v1569, %v1568
        %v1579 = vpack.c.b16 %v1571, %v1570
        %1588 = vmatprep.subr.bf16.mxu0 0
        %1589 = vmatpush1.bf16.msra.mxu0 %v1572
        %1590 = vmatprep.subr.bf16.mxu0 0
        %1591 = vmatpush1.bf16.msra.mxu0 %v1573
        %1592 = vmatprep.subr.bf16.mxu0 0
        %1593 = vmatpush1.bf16.msra.mxu0 %v1574
        %1594 = vmatprep.subr.bf16.mxu0 0
        %1595 = vmatpush1.bf16.msra.mxu0 %v1575
        %1596 = vmatprep.subr.bf16.mxu0 0
        %1597 = vmatpush1.bf16.msra.mxu0 %v1576
        %1598 = vmatprep.subr.bf16.mxu0 0
        %1599 = vmatpush1.bf16.msra.mxu0 %v1577
        %1600 = vmatprep.subr.bf16.mxu0 0
        %1601 = vmatpush1.bf16.msra.mxu0 %v1578
        %1602 = vmatprep.subr.bf16.mxu0 0
        %1603 = vmatpush1.bf16.msra.mxu0 %v1579
        %1604 = vmatprep.subr.bf16.mxu0 0
        %1605 = vmatpush1.bf16.msra.mxu0 0
        %1606 = vmatprep.subr.bf16.mxu0 0
        %1607 = vmatpush1.bf16.msra.mxu0 0
        %1608 = vmatprep.subr.bf16.mxu0 0
        %1609 = vmatpush1.bf16.msra.mxu0 0
        %1610 = vmatprep.subr.bf16.mxu0 0
        %1611 = vmatpush1.bf16.msra.mxu0 0
        %1612 = vmatprep.subr.bf16.mxu0 0
        %1613 = vmatpush1.bf16.msra.mxu0 0
        %1614 = vmatprep.subr.bf16.mxu0 0
        %1615 = vmatpush1.bf16.msra.mxu0 0
        %1616 = vmatprep.subr.bf16.mxu0 0
        %1617 = vmatpush1.bf16.msra.mxu0 0
        %1618 = vmatprep.subr.bf16.mxu0 0
        %1619 = vmatpush1.bf16.msra.mxu0 0
        %1620 = vmatprep.mubr.bf16.mxu0 0
        %1621 = vmatmul.mubr.bf16.gmra.mrb[0].mxu0 %v1316
        %v1622 = vpop.f32.mrb[0].mxu0
        %v1623 = vadd.f32 0.0, %v1622
        %v1624 = vpop.f32.mrb[0].mxu0
        %v1625 = vpop.f32.mrb[0].mxu0
        %v1626 = vpop.f32.mrb[0].mxu0
        %1627 = vmatprep.mubr.bf16.mxu0 0
        %1628 = vmatmul.mubr.bf16.gmra.mrb[0].mxu0 %v1317
        %v1629 = vpop.f32.mrb[0].mxu0
        %v1630 = vpop.f32.mrb[0].mxu0
        %v1631 = vpop.f32.mrb[0].mxu0
        %v1632 = vadd.f32 0.0, %v1631
        %v1633 = vpop.f32.mrb[0].mxu0
        %1634 = vmatprep.mubr.bf16.mxu0 0
        %1635 = vmatmul.mubr.bf16.gmra.mrb[0].mxu0 %v1318
        %v1636 = vpop.f32.mrb[0].mxu0
        %v1637 = vpop.f32.mrb[0].mxu0
        %v1638 = vpop.f32.mrb[0].mxu0
        %v1639 = vpop.f32.mrb[0].mxu0
        %1640 = vmatprep.mubr.bf16.mxu0 0
        %1641 = vmatmul.mubr.bf16.gmra.mrb[0].mxu0 %v1319
        %v1642 = vpop.f32.mrb[0].mxu0
        %v1643 = vadd.f32 0.0, %v1642
        %v1644 = vpop.f32.mrb[0].mxu0
        %v1645 = vpop.f32.mrb[0].mxu0
        %v1646 = vpop.f32.mrb[0].mxu0
        %1647 = vmatprep.mubr.bf16.mxu0 0
        %1648 = vmatmul.mubr.bf16.gmra.mrb[0].mxu0 %v1320
        %v1649 = vpop.f32.mrb[0].mxu0
        %v1650 = vpop.f32.mrb[0].mxu0
        %v1651 = vpop.f32.mrb[0].mxu0
        %v1652 = vadd.f32 0.0, %v1651
        %v1653 = vpop.f32.mrb[0].mxu0
        %1654 = vmatprep.mubr.bf16.mxu0 0
        %1655 = vmatmul.mubr.bf16.gmra.mrb[0].mxu0 %v1321
        %v1656 = vpop.f32.mrb[0].mxu0
        %v1657 = vpop.f32.mrb[0].mxu0
        %v1658 = vpop.f32.mrb[0].mxu0
        %v1659 = vpop.f32.mrb[0].mxu0
        %1660 = vdwg.mxu0
        %v1661 = vadd.f32 %v1519, %v1623
        %v1662 = vadd.f32 %v1520, %v1632
        %v1663 = vadd.f32 %v1521, %v1643
        %v1664 = vadd.f32 %v1522, %v1652
        %v1665 = vld [vmem:[#allocation2 + $0x10] sm:$0xff]
        %v1666 = vld [vmem:[#allocation2 + $0x18] sm:$0xff]
        %v1667 = vld [vmem:[#allocation2 + $0x20] sm:$0xff]
        %v1668 = vld [vmem:[#allocation2 + $0x28] sm:$0xff]
        %v1669 = vld [vmem:[#allocation2 + $0x30] sm:$0xff]
        %v1670 = vld [vmem:[#allocation2 + $0x38] sm:$0xff]
        %v1671 = vld [vmem:[#allocation2 + $0x40] sm:$0x1]
        %s1672 = scalar_lea.vmem [#allocation3], 320
        %v1673 = vld [vmem:[%s1672] sm:$0xf]
        %v1674 = vld [vmem:[%s1672 + $0x4] sm:$0xf]
        %v1675 = vld [vmem:[%s1672 + $0x8] sm:$0xf]
        %v1676 = vld [vmem:[%s1672 + $0xc] sm:$0xf]
        %v1677 = vld [vmem:[%s1672 + $0x10] sm:$0xf]
        %v1678 = vld [vmem:[%s1672 + $0x14] sm:$0xf]
        %v1679 = vld [vmem:[%s1672 + $0x18] sm:$0xf]
        %v1680 = vld [vmem:[%s1672 + $0x1c] sm:$0xf]
        %v1681 = vld [vmem:[%s1672 + $0x20] sm:$0xf]
        %v1682 = vld [vmem:[%s1672 + $0x24] sm:$0xf]
        %v1683 = vld [vmem:[%s1672 + $0x28] sm:$0xf]
        %v1684 = vld [vmem:[%s1672 + $0x2c] sm:$0xf]
        %v1685 = vld [vmem:[%s1672 + $0x30] sm:$0xf]
        %v1686 = vld [vmem:[%s1672 + $0x34] sm:$0xf]
        %v1687 = vld [vmem:[%s1672 + $0x38] sm:$0xf]
        %v1688 = vld [vmem:[%s1672 + $0x3c] sm:$0xf]
        %vm1689 = vsmask.f32 7424
        %v1691 = vshrl.u32 %v1665, 16
        %v1693 = vshll.u32 %v1665, 16
        %v1695 = vrot.slane %v1693, 1
        %v1696 = vor.u32 %v1691, %v1695
        %v1698 = vshll.u32 %v1666, 16
        %v1700 = vrot.slane %v1698, 1
        %v1701 = vsel %vm1689, %v1696, %v1700
        %v1702 = vshrl.u32 %v1666, 16
        %v1704 = vor.u32 %v1702, %v1700
        %v1706 = vshll.u32 %v1667, 16
        %v1708 = vrot.slane %v1706, 1
        %v1709 = vsel %vm1689, %v1704, %v1708
        %v1710 = vshrl.u32 %v1667, 16
        %v1712 = vor.u32 %v1710, %v1708
        %v1714 = vshll.u32 %v1668, 16
        %v1716 = vrot.slane %v1714, 1
        %v1717 = vsel %vm1689, %v1712, %v1716
        %v1718 = vshrl.u32 %v1668, 16
        %v1720 = vor.u32 %v1718, %v1716
        %v1722 = vshll.u32 %v1669, 16
        %v1724 = vrot.slane %v1722, 1
        %v1725 = vsel %vm1689, %v1720, %v1724
        %v1726 = vshrl.u32 %v1669, 16
        %v1728 = vor.u32 %v1726, %v1724
        %v1730 = vshll.u32 %v1670, 16
        %v1732 = vrot.slane %v1730, 1
        %v1733 = vsel %vm1689, %v1728, %v1732
        %v1734 = vshrl.u32 %v1670, 16
        %v1736 = vor.u32 %v1734, %v1732
        %v1738 = vshll.u32 %v1671, 16
        %v1740 = vrot.slane %v1738, 1
        %v1741 = vsel %vm1689, %v1736, %v1740
        %v1764 = vunpack.c.l.b16 %v1673
        %v1765 = vunpack.c.l.b16 %v1674
        %v1766 = vunpack.c.l.b16 %v1675
        %v1767 = vunpack.c.l.b16 %v1676
        %v1768 = vunpack.c.l.b16 %v1677
        %v1769 = vunpack.c.l.b16 %v1678
        %v1770 = vunpack.c.l.b16 %v1679
        %v1771 = vunpack.c.l.b16 %v1680
        %v1772 = vunpack.c.l.b16 %v1681
        %v1773 = vunpack.c.l.b16 %v1682
        %v1774 = vunpack.c.l.b16 %v1683
        %v1775 = vunpack.c.l.b16 %v1684
        %v1776 = vunpack.c.l.b16 %v1685
        %v1777 = vunpack.c.l.b16 %v1686
        %v1778 = vunpack.c.l.b16 %v1687
        %v1779 = vunpack.c.l.b16 %v1688
        %v1780 = vpack.c.b16 %v1765, %v1764
        %v1781 = vpack.c.b16 %v1767, %v1766
        %v1782 = vpack.c.b16 %v1769, %v1768
        %v1783 = vpack.c.b16 %v1771, %v1770
        %v1784 = vpack.c.b16 %v1773, %v1772
        %v1785 = vpack.c.b16 %v1775, %v1774
        %v1786 = vpack.c.b16 %v1777, %v1776
        %v1787 = vpack.c.b16 %v1779, %v1778
        %1796 = vmatprep.subr.bf16.mxu0 0
        %1797 = vmatpush1.bf16.msra.mxu0 %v1780
        %1798 = vmatprep.subr.bf16.mxu0 0
        %1799 = vmatpush1.bf16.msra.mxu0 %v1781
        %1800 = vmatprep.subr.bf16.mxu0 0
        %1801 = vmatpush1.bf16.msra.mxu0 %v1782
        %1802 = vmatprep.subr.bf16.mxu0 0
        %1803 = vmatpush1.bf16.msra.mxu0 %v1783
        %1804 = vmatprep.subr.bf16.mxu0 0
        %1805 = vmatpush1.bf16.msra.mxu0 %v1784
        %1806 = vmatprep.subr.bf16.mxu0 0
        %1807 = vmatpush1.bf16.msra.mxu0 %v1785
        %1808 = vmatprep.subr.bf16.mxu0 0
        %1809 = vmatpush1.bf16.msra.mxu0 %v1786
        %1810 = vmatprep.subr.bf16.mxu0 0
        %1811 = vmatpush1.bf16.msra.mxu0 %v1787
        %1812 = vmatprep.subr.bf16.mxu0 0
        %1813 = vmatpush1.bf16.msra.mxu0 0
        %1814 = vmatprep.subr.bf16.mxu0 0
        %1815 = vmatpush1.bf16.msra.mxu0 0
        %1816 = vmatprep.subr.bf16.mxu0 0
        %1817 = vmatpush1.bf16.msra.mxu0 0
        %1818 = vmatprep.subr.bf16.mxu0 0
        %1819 = vmatpush1.bf16.msra.mxu0 0
        %1820 = vmatprep.subr.bf16.mxu0 0
        %1821 = vmatpush1.bf16.msra.mxu0 0
        %1822 = vmatprep.subr.bf16.mxu0 0
        %1823 = vmatpush1.bf16.msra.mxu0 0
        %1824 = vmatprep.subr.bf16.mxu0 0
        %1825 = vmatpush1.bf16.msra.mxu0 0
        %1826 = vmatprep.subr.bf16.mxu0 0
        %1827 = vmatpush1.bf16.msra.mxu0 0
        %1828 = vmatprep.mubr.bf16.mxu0 0
        %1829 = vmatmul.mubr.bf16.gmra.mrb[0].mxu0 %v1701
        %v1830 = vpop.f32.mrb[0].mxu0
        %v1831 = vadd.f32 0.0, %v1830
        %v1832 = vpop.f32.mrb[0].mxu0
        %v1833 = vpop.f32.mrb[0].mxu0
        %v1834 = vpop.f32.mrb[0].mxu0
        %1835 = vmatprep.mubr.bf16.mxu0 0
        %1836 = vmatmul.mubr.bf16.gmra.mrb[0].mxu0 %v1709
        %v1837 = vpop.f32.mrb[0].mxu0
        %v1838 = vpop.f32.mrb[0].mxu0
        %v1839 = vpop.f32.mrb[0].mxu0
        %v1840 = vadd.f32 0.0, %v1839
        %v1841 = vpop.f32.mrb[0].mxu0
        %1842 = vmatprep.mubr.bf16.mxu0 0
        %1843 = vmatmul.mubr.bf16.gmra.mrb[0].mxu0 %v1717
        %v1844 = vpop.f32.mrb[0].mxu0
        %v1845 = vpop.f32.mrb[0].mxu0
        %v1846 = vpop.f32.mrb[0].mxu0
        %v1847 = vpop.f32.mrb[0].mxu0
        %1848 = vmatprep.mubr.bf16.mxu0 0
        %1849 = vmatmul.mubr.bf16.gmra.mrb[0].mxu0 %v1725
        %v1850 = vpop.f32.mrb[0].mxu0
        %v1851 = vadd.f32 0.0, %v1850
        %v1852 = vpop.f32.mrb[0].mxu0
        %v1853 = vpop.f32.mrb[0].mxu0
        %v1854 = vpop.f32.mrb[0].mxu0
        %1855 = vmatprep.mubr.bf16.mxu0 0
        %1856 = vmatmul.mubr.bf16.gmra.mrb[0].mxu0 %v1733
        %v1857 = vpop.f32.mrb[0].mxu0
        %v1858 = vpop.f32.mrb[0].mxu0
        %v1859 = vpop.f32.mrb[0].mxu0
        %v1860 = vadd.f32 0.0, %v1859
        %v1861 = vpop.f32.mrb[0].mxu0
        %1862 = vmatprep.mubr.bf16.mxu0 0
        %1863 = vmatmul.mubr.bf16.gmra.mrb[0].mxu0 %v1741
        %v1864 = vpop.f32.mrb[0].mxu0
        %v1865 = vpop.f32.mrb[0].mxu0
        %v1866 = vpop.f32.mrb[0].mxu0
        %v1867 = vpop.f32.mrb[0].mxu0
        %1868 = vdwg.mxu0
        %v1869 = vadd.f32 %v1661, %v1831
        %v1870 = vadd.f32 %v1662, %v1840
        %v1871 = vadd.f32 %v1663, %v1851
        %v1872 = vadd.f32 %v1664, %v1860
        %v1873 = vld [vmem:[#allocation2 + $0x18] sm:$0xf8]
        %v1874 = vld [vmem:[#allocation2 + $0x20] sm:$0xff]
        %v1875 = vld [vmem:[#allocation2 + $0x28] sm:$0xff]
        %v1876 = vld [vmem:[#allocation2 + $0x30] sm:$0xff]
        %v1877 = vld [vmem:[#allocation2 + $0x38] sm:$0xff]
        %v1878 = vld [vmem:[#allocation2 + $0x40] sm:$0xff]
        %v1879 = vld [vmem:[#allocation2 + $0x48] sm:$0xf]
        %s1880 = scalar_lea.vmem [#allocation3], 384
        %v1881 = vld [vmem:[%s1880] sm:$0xf]
        %v1882 = vld [vmem:[%s1880 + $0x4] sm:$0xf]
        %v1883 = vld [vmem:[%s1880 + $0x8] sm:$0xf]
        %v1884 = vld [vmem:[%s1880 + $0xc] sm:$0xf]
        %v1885 = vld [vmem:[%s1880 + $0x10] sm:$0xf]
        %v1886 = vld [vmem:[%s1880 + $0x14] sm:$0xf]
        %v1887 = vld [vmem:[%s1880 + $0x18] sm:$0xf]
        %v1888 = vld [vmem:[%s1880 + $0x1c] sm:$0xf]
        %v1889 = vld [vmem:[%s1880 + $0x20] sm:$0xf]
        %v1890 = vld [vmem:[%s1880 + $0x24] sm:$0xf]
        %v1891 = vld [vmem:[%s1880 + $0x28] sm:$0xf]
        %v1892 = vld [vmem:[%s1880 + $0x2c] sm:$0xf]
        %v1893 = vld [vmem:[%s1880 + $0x30] sm:$0xf]
        %v1894 = vld [vmem:[%s1880 + $0x34] sm:$0xf]
        %v1895 = vld [vmem:[%s1880 + $0x38] sm:$0xf]
        %v1896 = vld [vmem:[%s1880 + $0x3c] sm:$0xf]
        %v1898 = vshrl.u32 %v1873, 16
        %v1900 = vrot.slane %v1898, 3
        %v1901 = vshll.u32 %v1873, 16
        %v1903 = vrot.slane %v1901, 4
        %v1904 = vor.u32 %v1900, %v1903
        %v1906 = vshrl.u32 %v1874, 16
        %v1908 = vrot.slane %v1906, 3
        %v1909 = vshll.u32 %v1874, 16
        %v1911 = vrot.slane %v1909, 4
        %v1912 = vor.u32 %v1908, %v1911
        %v1913 = vsel %vm938, %v1904, %v1912
        %v1915 = vshrl.u32 %v1875, 16
        %v1917 = vrot.slane %v1915, 3
        %v1918 = vshll.u32 %v1875, 16
        %v1920 = vrot.slane %v1918, 4
        %v1921 = vor.u32 %v1917, %v1920
        %v1922 = vsel %vm938, %v1912, %v1921
        %v1924 = vshrl.u32 %v1876, 16
        %v1926 = vrot.slane %v1924, 3
        %v1927 = vshll.u32 %v1876, 16
        %v1929 = vrot.slane %v1927, 4
        %v1930 = vor.u32 %v1926, %v1929
        %v1931 = vsel %vm938, %v1921, %v1930
        %v1933 = vshrl.u32 %v1877, 16
        %v1935 = vrot.slane %v1933, 3
        %v1936 = vshll.u32 %v1877, 16
        %v1938 = vrot.slane %v1936, 4
        %v1939 = vor.u32 %v1935, %v1938
        %v1940 = vsel %vm938, %v1930, %v1939
        %v1942 = vshrl.u32 %v1878, 16
        %v1944 = vrot.slane %v1942, 3
        %v1945 = vshll.u32 %v1878, 16
        %v1947 = vrot.slane %v1945, 4
        %v1948 = vor.u32 %v1944, %v1947
        %v1949 = vsel %vm938, %v1939, %v1948
        %v1951 = vshrl.u32 %v1879, 16
        %v1953 = vrot.slane %v1951, 3
        %v1954 = vshll.u32 %v1879, 16
        %v1956 = vrot.slane %v1954, 4
        %v1957 = vor.u32 %v1953, %v1956
        %v1958 = vsel %vm938, %v1948, %v1957
        %v1981 = vunpack.c.l.b16 %v1881
        %v1982 = vunpack.c.l.b16 %v1882
        %v1983 = vunpack.c.l.b16 %v1883
        %v1984 = vunpack.c.l.b16 %v1884
        %v1985 = vunpack.c.l.b16 %v1885
        %v1986 = vunpack.c.l.b16 %v1886
        %v1987 = vunpack.c.l.b16 %v1887
        %v1988 = vunpack.c.l.b16 %v1888
        %v1989 = vunpack.c.l.b16 %v1889
        %v1990 = vunpack.c.l.b16 %v1890
        %v1991 = vunpack.c.l.b16 %v1891
        %v1992 = vunpack.c.l.b16 %v1892
        %v1993 = vunpack.c.l.b16 %v1893
        %v1994 = vunpack.c.l.b16 %v1894
        %v1995 = vunpack.c.l.b16 %v1895
        %v1996 = vunpack.c.l.b16 %v1896
        %v1997 = vpack.c.b16 %v1982, %v1981
        %v1998 = vpack.c.b16 %v1984, %v1983
        %v1999 = vpack.c.b16 %v1986, %v1985
        %v2000 = vpack.c.b16 %v1988, %v1987
        %v2001 = vpack.c.b16 %v1990, %v1989
        %v2002 = vpack.c.b16 %v1992, %v1991
        %v2003 = vpack.c.b16 %v1994, %v1993
        %v2004 = vpack.c.b16 %v1996, %v1995
        %2013 = vmatprep.subr.bf16.mxu0 0
        %2014 = vmatpush1.bf16.msra.mxu0 %v1997
        %2015 = vmatprep.subr.bf16.mxu0 0
        %2016 = vmatpush1.bf16.msra.mxu0 %v1998
        %2017 = vmatprep.subr.bf16.mxu0 0
        %2018 = vmatpush1.bf16.msra.mxu0 %v1999
        %2019 = vmatprep.subr.bf16.mxu0 0
        %2020 = vmatpush1.bf16.msra.mxu0 %v2000
        %2021 = vmatprep.subr.bf16.mxu0 0
        %2022 = vmatpush1.bf16.msra.mxu0 %v2001
        %2023 = vmatprep.subr.bf16.mxu0 0
        %2024 = vmatpush1.bf16.msra.mxu0 %v2002
        %2025 = vmatprep.subr.bf16.mxu0 0
        %2026 = vmatpush1.bf16.msra.mxu0 %v2003
        %2027 = vmatprep.subr.bf16.mxu0 0
        %2028 = vmatpush1.bf16.msra.mxu0 %v2004
        %2029 = vmatprep.subr.bf16.mxu0 0
        %2030 = vmatpush1.bf16.msra.mxu0 0
        %2031 = vmatprep.subr.bf16.mxu0 0
        %2032 = vmatpush1.bf16.msra.mxu0 0
        %2033 = vmatprep.subr.bf16.mxu0 0
        %2034 = vmatpush1.bf16.msra.mxu0 0
        %2035 = vmatprep.subr.bf16.mxu0 0
        %2036 = vmatpush1.bf16.msra.mxu0 0
        %2037 = vmatprep.subr.bf16.mxu0 0
        %2038 = vmatpush1.bf16.msra.mxu0 0
        %2039 = vmatprep.subr.bf16.mxu0 0
        %2040 = vmatpush1.bf16.msra.mxu0 0
        %2041 = vmatprep.subr.bf16.mxu0 0
        %2042 = vmatpush1.bf16.msra.mxu0 0
        %2043 = vmatprep.subr.bf16.mxu0 0
        %2044 = vmatpush1.bf16.msra.mxu0 0
        %2045 = vmatprep.mubr.bf16.mxu0 0
        %2046 = vmatmul.mubr.bf16.gmra.mrb[0].mxu0 %v1913
        %v2047 = vpop.f32.mrb[0].mxu0
        %v2048 = vadd.f32 0.0, %v2047
        %v2049 = vpop.f32.mrb[0].mxu0
        %v2050 = vpop.f32.mrb[0].mxu0
        %v2051 = vpop.f32.mrb[0].mxu0
        %2052 = vmatprep.mubr.bf16.mxu0 0
        %2053 = vmatmul.mubr.bf16.gmra.mrb[0].mxu0 %v1922
        %v2054 = vpop.f32.mrb[0].mxu0
        %v2055 = vpop.f32.mrb[0].mxu0
        %v2056 = vpop.f32.mrb[0].mxu0
        %v2057 = vadd.f32 0.0, %v2056
        %v2058 = vpop.f32.mrb[0].mxu0
        %2059 = vmatprep.mubr.bf16.mxu0 0
        %2060 = vmatmul.mubr.bf16.gmra.mrb[0].mxu0 %v1931
        %v2061 = vpop.f32.mrb[0].mxu0
        %v2062 = vpop.f32.mrb[0].mxu0
        %v2063 = vpop.f32.mrb[0].mxu0
        %v2064 = vpop.f32.mrb[0].mxu0
        %2065 = vmatprep.mubr.bf16.mxu0 0
        %2066 = vmatmul.mubr.bf16.gmra.mrb[0].mxu0 %v1940
        %v2067 = vpop.f32.mrb[0].mxu0
        %v2068 = vadd.f32 0.0, %v2067
        %v2069 = vpop.f32.mrb[0].mxu0
        %v2070 = vpop.f32.mrb[0].mxu0
        %v2071 = vpop.f32.mrb[0].mxu0
        %2072 = vmatprep.mubr.bf16.mxu0 0
        %2073 = vmatmul.mubr.bf16.gmra.mrb[0].mxu0 %v1949
        %v2074 = vpop.f32.mrb[0].mxu0
        %v2075 = vpop.f32.mrb[0].mxu0
        %v2076 = vpop.f32.mrb[0].mxu0
        %v2077 = vadd.f32 0.0, %v2076
        %v2078 = vpop.f32.mrb[0].mxu0
        %2079 = vmatprep.mubr.bf16.mxu0 0
        %2080 = vmatmul.mubr.bf16.gmra.mrb[0].mxu0 %v1958
        %v2081 = vpop.f32.mrb[0].mxu0
        %v2082 = vpop.f32.mrb[0].mxu0
        %v2083 = vpop.f32.mrb[0].mxu0
        %v2084 = vpop.f32.mrb[0].mxu0
        %2085 = vdwg.mxu0
        %v2086 = vadd.f32 %v1869, %v2048
        %v2087 = vadd.f32 %v1870, %v2057
        %v2088 = vadd.f32 %v1871, %v2068
        %v2089 = vadd.f32 %v1872, %v2077
        %v2090 = vld [vmem:[#allocation2 + $0x18] sm:$0xf0]
        %s2091 = scalar_lea.vmem [#allocation3], 448
        %v2092 = vld [vmem:[%s2091] sm:$0xf]
        %v2093 = vld [vmem:[%s2091 + $0x4] sm:$0xf]
        %v2094 = vld [vmem:[%s2091 + $0x8] sm:$0xf]
        %v2095 = vld [vmem:[%s2091 + $0xc] sm:$0xf]
        %v2096 = vld [vmem:[%s2091 + $0x10] sm:$0xf]
        %v2097 = vld [vmem:[%s2091 + $0x14] sm:$0xf]
        %v2098 = vld [vmem:[%s2091 + $0x18] sm:$0xf]
        %v2099 = vld [vmem:[%s2091 + $0x1c] sm:$0xf]
        %v2100 = vld [vmem:[%s2091 + $0x20] sm:$0xf]
        %v2101 = vld [vmem:[%s2091 + $0x24] sm:$0xf]
        %v2102 = vld [vmem:[%s2091 + $0x28] sm:$0xf]
        %v2103 = vld [vmem:[%s2091 + $0x2c] sm:$0xf]
        %v2104 = vld [vmem:[%s2091 + $0x30] sm:$0xf]
        %v2105 = vld [vmem:[%s2091 + $0x34] sm:$0xf]
        %v2106 = vld [vmem:[%s2091 + $0x38] sm:$0xf]
        %v2107 = vld [vmem:[%s2091 + $0x3c] sm:$0xf]
        %v2115 = vrot.slane %v2090, 4
        %v2116 = vrot.slane %v1874, 4
        %v2117 = vsel %vm797, %v2115, %v2116
        %v2118 = vrot.slane %v1875, 4
        %v2119 = vsel %vm797, %v2116, %v2118
        %v2120 = vrot.slane %v1876, 4
        %v2121 = vsel %vm797, %v2118, %v2120
        %v2122 = vrot.slane %v1877, 4
        %v2123 = vsel %vm797, %v2120, %v2122
        %v2124 = vrot.slane %v1878, 4
        %v2125 = vsel %vm797, %v2122, %v2124
        %v2126 = vrot.slane %v1879, 4
        %v2127 = vsel %vm797, %v2124, %v2126
        %v2150 = vunpack.c.l.b16 %v2092
        %v2151 = vunpack.c.l.b16 %v2093
        %v2152 = vunpack.c.l.b16 %v2094
        %v2153 = vunpack.c.l.b16 %v2095
        %v2154 = vunpack.c.l.b16 %v2096
        %v2155 = vunpack.c.l.b16 %v2097
        %v2156 = vunpack.c.l.b16 %v2098
        %v2157 = vunpack.c.l.b16 %v2099
        %v2158 = vunpack.c.l.b16 %v2100
        %v2159 = vunpack.c.l.b16 %v2101
        %v2160 = vunpack.c.l.b16 %v2102
        %v2161 = vunpack.c.l.b16 %v2103
        %v2162 = vunpack.c.l.b16 %v2104
        %v2163 = vunpack.c.l.b16 %v2105
        %v2164 = vunpack.c.l.b16 %v2106
        %v2165 = vunpack.c.l.b16 %v2107
        %v2166 = vpack.c.b16 %v2151, %v2150
        %v2167 = vpack.c.b16 %v2153, %v2152
        %v2168 = vpack.c.b16 %v2155, %v2154
        %v2169 = vpack.c.b16 %v2157, %v2156
        %v2170 = vpack.c.b16 %v2159, %v2158
        %v2171 = vpack.c.b16 %v2161, %v2160
        %v2172 = vpack.c.b16 %v2163, %v2162
        %v2173 = vpack.c.b16 %v2165, %v2164
        %2182 = vmatprep.subr.bf16.mxu0 0
        %2183 = vmatpush1.bf16.msra.mxu0 %v2166
        %2184 = vmatprep.subr.bf16.mxu0 0
        %2185 = vmatpush1.bf16.msra.mxu0 %v2167
        %2186 = vmatprep.subr.bf16.mxu0 0
        %2187 = vmatpush1.bf16.msra.mxu0 %v2168
        %2188 = vmatprep.subr.bf16.mxu0 0
        %2189 = vmatpush1.bf16.msra.mxu0 %v2169
        %2190 = vmatprep.subr.bf16.mxu0 0
        %2191 = vmatpush1.bf16.msra.mxu0 %v2170
        %2192 = vmatprep.subr.bf16.mxu0 0
        %2193 = vmatpush1.bf16.msra.mxu0 %v2171
        %2194 = vmatprep.subr.bf16.mxu0 0
        %2195 = vmatpush1.bf16.msra.mxu0 %v2172
        %2196 = vmatprep.subr.bf16.mxu0 0
        %2197 = vmatpush1.bf16.msra.mxu0 %v2173
        %2198 = vmatprep.subr.bf16.mxu0 0
        %2199 = vmatpush1.bf16.msra.mxu0 0
        %2200 = vmatprep.subr.bf16.mxu0 0
        %2201 = vmatpush1.bf16.msra.mxu0 0
        %2202 = vmatprep.subr.bf16.mxu0 0
        %2203 = vmatpush1.bf16.msra.mxu0 0
        %2204 = vmatprep.subr.bf16.mxu0 0
        %2205 = vmatpush1.bf16.msra.mxu0 0
        %2206 = vmatprep.subr.bf16.mxu0 0
        %2207 = vmatpush1.bf16.msra.mxu0 0
        %2208 = vmatprep.subr.bf16.mxu0 0
        %2209 = vmatpush1.bf16.msra.mxu0 0
        %2210 = vmatprep.subr.bf16.mxu0 0
        %2211 = vmatpush1.bf16.msra.mxu0 0
        %2212 = vmatprep.subr.bf16.mxu0 0
        %2213 = vmatpush1.bf16.msra.mxu0 0
        %2214 = vmatprep.mubr.bf16.mxu0 0
        %2215 = vmatmul.mubr.bf16.gmra.mrb[0].mxu0 %v2117
        %v2216 = vpop.f32.mrb[0].mxu0
        %v2217 = vadd.f32 0.0, %v2216
        %v2218 = vpop.f32.mrb[0].mxu0
        %v2219 = vpop.f32.mrb[0].mxu0
        %v2220 = vpop.f32.mrb[0].mxu0
        %2221 = vmatprep.mubr.bf16.mxu0 0
        %2222 = vmatmul.mubr.bf16.gmra.mrb[0].mxu0 %v2119
        %v2223 = vpop.f32.mrb[0].mxu0
        %v2224 = vpop.f32.mrb[0].mxu0
        %v2225 = vpop.f32.mrb[0].mxu0
        %v2226 = vadd.f32 0.0, %v2225
        %v2227 = vpop.f32.mrb[0].mxu0
        %2228 = vmatprep.mubr.bf16.mxu0 0
        %2229 = vmatmul.mubr.bf16.gmra.mrb[0].mxu0 %v2121
        %v2230 = vpop.f32.mrb[0].mxu0
        %v2231 = vpop.f32.mrb[0].mxu0
        %v2232 = vpop.f32.mrb[0].mxu0
        %v2233 = vpop.f32.mrb[0].mxu0
        %2234 = vmatprep.mubr.bf16.mxu0 0
        %2235 = vmatmul.mubr.bf16.gmra.mrb[0].mxu0 %v2123
        %v2236 = vpop.f32.mrb[0].mxu0
        %v2237 = vadd.f32 0.0, %v2236
        %v2238 = vpop.f32.mrb[0].mxu0
        %v2239 = vpop.f32.mrb[0].mxu0
        %v2240 = vpop.f32.mrb[0].mxu0
        %2241 = vmatprep.mubr.bf16.mxu0 0
        %2242 = vmatmul.mubr.bf16.gmra.mrb[0].mxu0 %v2125
        %v2243 = vpop.f32.mrb[0].mxu0
        %v2244 = vpop.f32.mrb[0].mxu0
        %v2245 = vpop.f32.mrb[0].mxu0
        %v2246 = vadd.f32 0.0, %v2245
        %v2247 = vpop.f32.mrb[0].mxu0
        %2248 = vmatprep.mubr.bf16.mxu0 0
        %2249 = vmatmul.mubr.bf16.gmra.mrb[0].mxu0 %v2127
        %v2250 = vpop.f32.mrb[0].mxu0
        %v2251 = vpop.f32.mrb[0].mxu0
        %v2252 = vpop.f32.mrb[0].mxu0
        %v2253 = vpop.f32.mrb[0].mxu0
        %2254 = vdwg.mxu0
        %v2255 = vadd.f32 %v2086, %v2217
        %v2256 = vadd.f32 %v2087, %v2226
        %v2257 = vadd.f32 %v2088, %v2237
        %v2258 = vadd.f32 %v2089, %v2246
        %v2259 = vld [vmem:[#allocation2 + $0x48] sm:$0x1f]
        %s2260 = scalar_lea.vmem [#allocation3], 512
        %v2261 = vld [vmem:[%s2260] sm:$0xf]
        %v2262 = vld [vmem:[%s2260 + $0x4] sm:$0xf]
        %v2263 = vld [vmem:[%s2260 + $0x8] sm:$0xf]
        %v2264 = vld [vmem:[%s2260 + $0xc] sm:$0xf]
        %v2265 = vld [vmem:[%s2260 + $0x10] sm:$0xf]
        %v2266 = vld [vmem:[%s2260 + $0x14] sm:$0xf]
        %v2267 = vld [vmem:[%s2260 + $0x18] sm:$0xf]
        %v2268 = vld [vmem:[%s2260 + $0x1c] sm:$0xf]
        %v2269 = vld [vmem:[%s2260 + $0x20] sm:$0xf]
        %v2270 = vld [vmem:[%s2260 + $0x24] sm:$0xf]
        %v2271 = vld [vmem:[%s2260 + $0x28] sm:$0xf]
        %v2272 = vld [vmem:[%s2260 + $0x2c] sm:$0xf]
        %v2273 = vld [vmem:[%s2260 + $0x30] sm:$0xf]
        %v2274 = vld [vmem:[%s2260 + $0x34] sm:$0xf]
        %v2275 = vld [vmem:[%s2260 + $0x38] sm:$0xf]
        %v2276 = vld [vmem:[%s2260 + $0x3c] sm:$0xf]
        %v2278 = vshrl.u32 %v2090, 16
        %v2280 = vrot.slane %v2278, 4
        %v2281 = vshll.u32 %v2090, 16
        %v2283 = vrot.slane %v2281, 5
        %v2284 = vor.u32 %v2280, %v2283
        %v2285 = vrot.slane %v1906, 4
        %v2286 = vrot.slane %v1909, 5
        %v2287 = vor.u32 %v2285, %v2286
        %v2288 = vsel %vm1146, %v2284, %v2287
        %v2289 = vrot.slane %v1915, 4
        %v2290 = vrot.slane %v1918, 5
        %v2291 = vor.u32 %v2289, %v2290
        %v2292 = vsel %vm1146, %v2287, %v2291
        %v2293 = vrot.slane %v1924, 4
        %v2294 = vrot.slane %v1927, 5
        %v2295 = vor.u32 %v2293, %v2294
        %v2296 = vsel %vm1146, %v2291, %v2295
        %v2297 = vrot.slane %v1933, 4
        %v2298 = vrot.slane %v1936, 5
        %v2299 = vor.u32 %v2297, %v2298
        %v2300 = vsel %vm1146, %v2295, %v2299
        %v2301 = vrot.slane %v1942, 4
        %v2302 = vrot.slane %v1945, 5
        %v2303 = vor.u32 %v2301, %v2302
        %v2304 = vsel %vm1146, %v2299, %v2303
        %v2306 = vshrl.u32 %v2259, 16
        %v2308 = vrot.slane %v2306, 4
        %v2309 = vshll.u32 %v2259, 16
        %v2311 = vrot.slane %v2309, 5
        %v2312 = vor.u32 %v2308, %v2311
        %v2313 = vsel %vm1146, %v2303, %v2312
        %v2336 = vunpack.c.l.b16 %v2261
        %v2337 = vunpack.c.l.b16 %v2262
        %v2338 = vunpack.c.l.b16 %v2263
        %v2339 = vunpack.c.l.b16 %v2264
        %v2340 = vunpack.c.l.b16 %v2265
        %v2341 = vunpack.c.l.b16 %v2266
        %v2342 = vunpack.c.l.b16 %v2267
        %v2343 = vunpack.c.l.b16 %v2268
        %v2344 = vunpack.c.l.b16 %v2269
        %v2345 = vunpack.c.l.b16 %v2270
        %v2346 = vunpack.c.l.b16 %v2271
        %v2347 = vunpack.c.l.b16 %v2272
        %v2348 = vunpack.c.l.b16 %v2273
        %v2349 = vunpack.c.l.b16 %v2274
        %v2350 = vunpack.c.l.b16 %v2275
        %v2351 = vunpack.c.l.b16 %v2276
        %v2352 = vpack.c.b16 %v2337, %v2336
        %v2353 = vpack.c.b16 %v2339, %v2338
        %v2354 = vpack.c.b16 %v2341, %v2340
        %v2355 = vpack.c.b16 %v2343, %v2342
        %v2356 = vpack.c.b16 %v2345, %v2344
        %v2357 = vpack.c.b16 %v2347, %v2346
        %v2358 = vpack.c.b16 %v2349, %v2348
        %v2359 = vpack.c.b16 %v2351, %v2350
        %2368 = vmatprep.subr.bf16.mxu0 0
        %2369 = vmatpush1.bf16.msra.mxu0 %v2352
        %2370 = vmatprep.subr.bf16.mxu0 0
        %2371 = vmatpush1.bf16.msra.mxu0 %v2353
        %2372 = vmatprep.subr.bf16.mxu0 0
        %2373 = vmatpush1.bf16.msra.mxu0 %v2354
        %2374 = vmatprep.subr.bf16.mxu0 0
        %2375 = vmatpush1.bf16.msra.mxu0 %v2355
        %2376 = vmatprep.subr.bf16.mxu0 0
        %2377 = vmatpush1.bf16.msra.mxu0 %v2356
        %2378 = vmatprep.subr.bf16.mxu0 0
        %2379 = vmatpush1.bf16.msra.mxu0 %v2357
        %2380 = vmatprep.subr.bf16.mxu0 0
        %2381 = vmatpush1.bf16.msra.mxu0 %v2358
        %2382 = vmatprep.subr.bf16.mxu0 0
        %2383 = vmatpush1.bf16.msra.mxu0 %v2359
        %2384 = vmatprep.subr.bf16.mxu0 0
        %2385 = vmatpush1.bf16.msra.mxu0 0
        %2386 = vmatprep.subr.bf16.mxu0 0
        %2387 = vmatpush1.bf16.msra.mxu0 0
        %2388 = vmatprep.subr.bf16.mxu0 0
        %2389 = vmatpush1.bf16.msra.mxu0 0
        %2390 = vmatprep.subr.bf16.mxu0 0
        %2391 = vmatpush1.bf16.msra.mxu0 0
        %2392 = vmatprep.subr.bf16.mxu0 0
        %2393 = vmatpush1.bf16.msra.mxu0 0
        %2394 = vmatprep.subr.bf16.mxu0 0
        %2395 = vmatpush1.bf16.msra.mxu0 0
        %2396 = vmatprep.subr.bf16.mxu0 0
        %2397 = vmatpush1.bf16.msra.mxu0 0
        %2398 = vmatprep.subr.bf16.mxu0 0
        %2399 = vmatpush1.bf16.msra.mxu0 0
        %2400 = vmatprep.mubr.bf16.mxu0 0
        %2401 = vmatmul.mubr.bf16.gmra.mrb[0].mxu0 %v2288
        %v2402 = vpop.f32.mrb[0].mxu0
        %v2403 = vadd.f32 0.0, %v2402
        %v2404 = vpop.f32.mrb[0].mxu0
        %v2405 = vpop.f32.mrb[0].mxu0
        %v2406 = vpop.f32.mrb[0].mxu0
        %2407 = vmatprep.mubr.bf16.mxu0 0
        %2408 = vmatmul.mubr.bf16.gmra.mrb[0].mxu0 %v2292
        %v2409 = vpop.f32.mrb[0].mxu0
        %v2410 = vpop.f32.mrb[0].mxu0
        %v2411 = vpop.f32.mrb[0].mxu0
        %v2412 = vadd.f32 0.0, %v2411
        %v2413 = vpop.f32.mrb[0].mxu0
        %2414 = vmatprep.mubr.bf16.mxu0 0
        %2415 = vmatmul.mubr.bf16.gmra.mrb[0].mxu0 %v2296
        %v2416 = vpop.f32.mrb[0].mxu0
        %v2417 = vpop.f32.mrb[0].mxu0
        %v2418 = vpop.f32.mrb[0].mxu0
        %v2419 = vpop.f32.mrb[0].mxu0
        %2420 = vmatprep.mubr.bf16.mxu0 0
        %2421 = vmatmul.mubr.bf16.gmra.mrb[0].mxu0 %v2300
        %v2422 = vpop.f32.mrb[0].mxu0
        %v2423 = vadd.f32 0.0, %v2422
        %v2424 = vpop.f32.mrb[0].mxu0
        %v2425 = vpop.f32.mrb[0].mxu0
        %v2426 = vpop.f32.mrb[0].mxu0
        %2427 = vmatprep.mubr.bf16.mxu0 0
        %2428 = vmatmul.mubr.bf16.gmra.mrb[0].mxu0 %v2304
        %v2429 = vpop.f32.mrb[0].mxu0
        %v2430 = vpop.f32.mrb[0].mxu0
        %v2431 = vpop.f32.mrb[0].mxu0
        %v2432 = vadd.f32 0.0, %v2431
        %v2433 = vpop.f32.mrb[0].mxu0
        %2434 = vmatprep.mubr.bf16.mxu0 0
        %2435 = vmatmul.mubr.bf16.gmra.mrb[0].mxu0 %v2313
        %v2436 = vpop.f32.mrb[0].mxu0
        %v2437 = vpop.f32.mrb[0].mxu0
        %v2438 = vpop.f32.mrb[0].mxu0
        %v2439 = vpop.f32.mrb[0].mxu0
        %2440 = vdwg.mxu0
        %v2441 = vadd.f32 %v2255, %v2403
        %v2442 = vadd.f32 %v2256, %v2412
        %v2443 = vadd.f32 %v2257, %v2423
        %v2444 = vadd.f32 %v2258, %v2432
        %v2447 = vunpack.c.l.b16 %v657
        %v2448 = vunpack.c.h.b16 %v657
        %v2449 = vunpack.c.l.b16 %v658
        %v2450 = vunpack.c.h.b16 %v658
        %v2451 = vpack.c.b16 %v2447, %v2447
        %v2452 = vpack.c.b16 %v2448, %v2448
        %v2453 = vpack.c.b16 %v2449, %v2449
        %v2454 = vpack.c.b16 %v2450, %v2450
        %v2459 = vunpack.c.l.bf16 %v2451
        %v2460 = vunpack.c.l.bf16 %v2452
        %v2461 = vunpack.c.l.bf16 %v2453
        %v2462 = vunpack.c.l.bf16 %v2454
        %v2463 = vadd.f32 %v2441, %v2459
        %v2464 = vadd.f32 %v2442, %v2460
        %v2465 = vadd.f32 %v2443, %v2461
        %v2466 = vadd.f32 %v2444, %v2462
        %v2467 = vld [vmem:[%s4] sm:$0x1]
        %v2469 = vlaneseq
        %v2470 = vshrl.u32 %v2469, 7
        %v2471 = vsub.s32 0, %v2470
        %v2472 = vrot.slane %v2467, %v2471
        %v2474 = vadd.f32 %v2463, %v2472
        %v2475 = vadd.f32 %v2464, %v2472
        %v2476 = vadd.f32 %v2465, %v2472
        %v2477 = vadd.f32 %v2466, %v2472
        %v2478 = vmax.f32 %v2474, 0.0
        %v2479 = vmax.f32 %v2475, 0.0
        %v2480 = vmax.f32 %v2476, 0.0
        %v2481 = vmax.f32 %v2477, 0.0
        %v2482 = vpack.c.bf16 %v2478, %v2478
        %v2483 = vpack.c.bf16 %v2479, %v2479
        %v2484 = vpack.c.bf16 %v2480, %v2480
        %v2485 = vpack.c.bf16 %v2481, %v2481
        %2486 = vst [vmem:[%s258] sm:$0xf] %v2482
        %2487 = vst [vmem:[%s258 + $0x4] sm:$0xf] %v2483
        %2488 = vst [vmem:[%s258 + $0x8] sm:$0xf] %v2484
        %2489 = vst [vmem:[%s258 + $0xc] sm:$0xf] %v2485
        %s2490 = sand.u32 %s158, 1
        %s2491 = scalar_lea.sflag [#allocation5], %s2490
        %s2492 = sand.u32 %s158, 1
        %s2493 = smul.addr %s2492, 16
        %s2494 = scalar_lea.vmem [#allocation6], %s2493
        // Predicated region
        $region45: #{tpu_custom_call.1} parent=39 // pred_check
          %p2495 = pneg %p168
        $region46: #{tpu_custom_call.1} parent=39 // pred_check_branch
          %2497 = sbr.rel (%p2495) target = $region48
        $region47: #{tpu_custom_call.1} parent=39 // pred_region
          %s2498 = smul.u32 %s24, 2
          %s2499 = sadd.s32 %s2498, %s25
          %s2501 = ssub.s32 256, 256
          %2502 = vsyncadd %s2491, %s2501
          %s2503 = smul.addr %s2499, 4
          %s2504 = smul.addr %s2503, 64
          %s2505 = scalar_lea.hbm %s5, %s2504
          %s2506 = sshll.u32 %s2494, 4
          %s2507 = int_to_ptr.vmem [resolvable:$true] %s2506
          %2512 = dma.vmem_to_hbm [thread:$0]  %s2507, 256, %s2505, %s2491, 64, 64, 4
        $region48: #{tpu_custom_call.1} parent=39 // pred_fallthru
          _
      $region40: #{tpu_custom_call.1} parent=5 // pred_fallthru
        _
      %p2513 = scmp.le.s32.totalorder 2, %s15
      // Predicated region
      $region49: #{tpu_custom_call.1} parent=5 // pred_check
        %p2514 = pneg %p2513
      $region50: #{tpu_custom_call.1} parent=5 // pred_check_branch
        %2516 = sbr.rel (%p2514) target = $region52
      $region51: #{tpu_custom_call.1} parent=5 // pred_region
        %s2517 = ssub.s32 %s15, 2
        // Predicated region
        $region53: #{tpu_custom_call.1} parent=51 // pred_check
          %p2518 = pneg %p174
        $region54: #{tpu_custom_call.1} parent=51 // pred_check_branch
          %2520 = sbr.rel (%p2518) target = $region56
        $region55: #{tpu_custom_call.1} parent=51 // pred_region
          %s2521 = sand.u32 %s159, 1
          %s2522 = scalar_lea.sflag [#allocation5], %s2521
          %s2523 = sand.u32 %s159, 1
          %s2524 = smul.addr %s2523, 16
          %s2525 = scalar_lea.vmem [#allocation6], %s2524
          %2526 = dma.done %s2522, 256
        $region56: #{tpu_custom_call.1} parent=51 // pred_fallthru
          _
      $region52: #{tpu_custom_call.1} parent=5 // pred_fallthru
        _
    $region6: #{tpu_custom_call.1} parent=1 // loop_footer
      %s19 = sadd.s32 1, %s15
    $region7: #{tpu_custom_call.1} parent=1 // loop_footer_branch
      %14 = sbr.rel target = $region3
    $region8: #{tpu_custom_call.1} parent=1 // loop_exit
      _
    %2527 = vsyncpa [#allocation4], 1
    %s2528 = scalar_lea.sflag [#allocation4], 1
    %2529 = vsyncpa %s2528, 1
    %2530 = vsyncpa [#allocation5], 1
    %s2531 = scalar_lea.sflag [#allocation5], 1
    %2532 = vsyncpa %s2531, 1

</llo_original>
